<compile_context>
chip_gen: v5e
topology: v5e:2x2
jax: 0.10.0
libtpu: 0.0.40
codegen_flags: <defaults>
</compile_context>

<pallas_src>
import functools

import jax
import jax.numpy as jnp
import numpy as np
from jax import lax
from jax.experimental import pallas as pl
from jax.experimental.pallas import tpu as pltpu

KSIZE = 3   # kernel_size=3, padding=1 ('same' conv)
LANE = 128


def _round_up(x, m):
    return (x + m - 1) // m * m


def convlstm_kernel(xcat_ref, prevc_ref, w_ref, b_ref, hid_ref, cell_ref, *,
                    img_w):
    # xcat_ref : (1, (H+2)*W, Kp)  bf16  dx-packed, 'same'-padded patches
    # prevc_ref: (1, H*W, Hc)      f32
    # w_ref    : (3, Kp, 4*Hc)     bf16  [dy, dx*Cin + cin (zero-padded), cout]
    # b_ref    : (1, 4*Hc)         f32
    # hid_ref  : (1, H*W, Hc)      f32 out
    # cell_ref : (1, H*W, Hc)      f32 out
    rows = hid_ref.shape[1]                 # H*W  (MXU M dimension)
    Hc = hid_ref.shape[2]
    G = 4 * Hc
    f32 = jnp.float32

    # ---- gate conv: 3 MXU matmuls (one per kernel row), f32 accumulation ----
    acc = jnp.broadcast_to(b_ref[...].astype(f32), (rows, G))
    for dy in range(KSIZE):                 # statically unrolled
        r0 = dy * img_w                     # multiple of W -> sublane aligned
        patch = xcat_ref[0, r0:r0 + rows, :]            # (rows, Kp) bf16
        acc = acc + jnp.dot(patch, w_ref[dy],
                            preferred_element_type=f32)

    # ---- LSTM update --------------------------------------------------------
    # Full-width EUP passes (sigmoid + tanh over all 4*Hc lanes), sliced once.
    # PyTorch chunk(4, channel) order: [in, remember, out, cell].
    sg = jax.nn.sigmoid(acc)
    th = jnp.tanh(acc)
    in_gate = sg[:, 0 * Hc:1 * Hc]
    rem_gate = sg[:, 1 * Hc:2 * Hc]
    out_gate = sg[:, 2 * Hc:3 * Hc]
    cell_gate = th[:, 3 * Hc:4 * Hc]

    prev_cell = prevc_ref[0].astype(f32)                # (rows, Hc)
    cell = rem_gate * prev_cell + in_gate * cell_gate
    hidden = out_gate * jnp.tanh(cell)

    cell_ref[0] = cell.astype(cell_ref.dtype)
    hid_ref[0] = hidden.astype(hid_ref.dtype)


def conv_lstm2d(x, prev_hidden, prev_cell, w3_f32, bias):
    """ConvLSTM2d forward.

    x: (B,H,W,Cx) f32 NHWC; prev_hidden/prev_cell: (B,H,W,Hc) f32;
    w3_f32: (3, 3*Cin, 4*Hc) f32 packed Conv2d weight (see pack_gate_weight);
    bias: (4*Hc,) f32.  Returns (hidden, cell) in NHWC.
    """
    B, H, W, Cx = x.shape
    Hc = prev_hidden.shape[-1]
    Cin = Cx + Hc
    G = 4 * Hc
    K = KSIZE * Cin
    Kp = _round_up(K, LANE)                 # contraction dim padded to 128
    rows = H * W
    prows = (H + 2) * W

    # ---- host-side (XLA) prep: concat -> bf16 -> pad -> dx-pack -> K-pad ----
    stacked = jnp.concatenate([x, prev_hidden], axis=-1).astype(jnp.bfloat16)
    xpad = jnp.pad(stacked, ((0, 0), (1, 1), (1, 1), (0, 0)))   # (B,H+2,W+2,Cin)
    # xcat[b, h'*W + w, dx*Cin + c] = xpad[b, h', w + dx, c]
    xcat = jnp.concatenate(
        [xpad[:, :, dx:dx + W, :] for dx in range(KSIZE)], axis=-1)
    xcat = xcat.reshape(B, prows, K)
    xcat = jnp.pad(xcat, ((0, 0), (0, 0), (0, Kp - K)))         # (B,(H+2)*W,Kp)

    w_p = jnp.pad(w3_f32, ((0, 0), (0, Kp - K), (0, 0))).astype(jnp.bfloat16)
    bias2d = bias.reshape(1, G).astype(jnp.float32)
    prevc = prev_cell.reshape(B, rows, Hc)                      # matmul-row layout

    out_shape = (jax.ShapeDtypeStruct((B, rows, Hc), x.dtype),
                 jax.ShapeDtypeStruct((B, rows, Hc), x.dtype))

    grid_spec = pltpu.PrefetchScalarGridSpec(
        num_scalar_prefetch=0,
        grid=(B,),
        in_specs=[
            pl.BlockSpec((1, prows, Kp), lambda b: (b, 0, 0)),
            pl.BlockSpec((1, rows, Hc), lambda b: (b, 0, 0)),
            pl.BlockSpec((KSIZE, Kp, G), lambda b: (0, 0, 0)),   # fetched once
            pl.BlockSpec((1, G), lambda b: (0, 0)),
        ],
        out_specs=[
            pl.BlockSpec((1, rows, Hc), lambda b: (b, 0, 0)),
            pl.BlockSpec((1, rows, Hc), lambda b: (b, 0, 0)),
        ],
    )

    hidden, cell = pl.pallas_call(
        functools.partial(convlstm_kernel, img_w=W),
        out_shape=out_shape,
        grid_spec=grid_spec,
        compiler_params=pltpu.CompilerParams(
            # v7x: two TensorCores split the batch; single-TC chips just loop.
            dimension_semantics=("parallel",)),
    )(xcat, prevc, w_p, bias2d)

    return hidden.reshape(B, H, W, Hc), cell.reshape(B, H, W, Hc)


def pack_gate_weight(w_oihw):
    """Torch Conv2d weight (Cout, Cin, kh, kw) -> (kh, kw*Cin, Cout)."""
    cout, cin, kh, kw = w_oihw.shape
    return jnp.transpose(w_oihw, (2, 3, 1, 0)).reshape(kh, kw * cin, cout)


def reference_conv_lstm2d(x, prev_hidden, prev_cell, w3_f32, bias):
    """Plain-JAX f32 reference (NHWC) mirroring the PyTorch forward."""
    Hc = prev_hidden.shape[-1]
    Cin = x.shape[-1] + Hc
    stacked = jnp.concatenate([x, prev_hidden], axis=-1)
    w_hwio = w3_f32.reshape(KSIZE, KSIZE, Cin, 4 * Hc)
    gates = lax.conv_general_dilated(
        stacked, w_hwio, window_strides=(1, 1), padding="SAME",
        dimension_numbers=("NHWC", "HWIO", "NHWC"),
        precision=lax.Precision.HIGHEST) + bias
    i = jax.nn.sigmoid(gates[..., 0 * Hc:1 * Hc])
    r = jax.nn.sigmoid(gates[..., 1 * Hc:2 * Hc])
    o = jax.nn.sigmoid(gates[..., 2 * Hc:3 * Hc])
    g = jnp.tanh(gates[..., 3 * Hc:4 * Hc])
    cell = r * prev_cell + i * g
    hidden = o * jnp.tanh(cell)
    return hidden, cell


if __name__ == "__main__":
    # Small shapes consistent with the module (PyTorch would take NCHW (2,4,16,16)).
    B, H, W = 2, 16, 16
    input_size, hidden_size = 4, 32
    Cin = input_size + hidden_size
    Cout = 4 * hidden_size

    key = jax.random.PRNGKey(0)
    kx, kh, kc, kw, kb = jax.random.split(key, 5)

    x = jax.random.normal(kx, (B, H, W, input_size), jnp.float32)
    prev_hidden = jax.random.normal(kh, (B, H, W, hidden_size), jnp.float32)
    prev_cell = jax.random.normal(kc, (B, H, W, hidden_size), jnp.float32)

    # Deterministic Conv2d-style init: weight (Cout, Cin, 3, 3), bias (Cout,),
    # uniform(-1/sqrt(fan_in), 1/sqrt(fan_in)).
    fan_in = Cin * KSIZE * KSIZE
    bound = 1.0 / np.sqrt(fan_in)
    w_torch = jax.random.uniform(kw, (Cout, Cin, KSIZE, KSIZE),
                                 jnp.float32, -bound, bound)
    bias = jax.random.uniform(kb, (Cout,), jnp.float32, -bound, bound)

    w3_f32 = pack_gate_weight(w_torch)                 # (3, 3*Cin, Cout)

    conv_lstm2d_jit = jax.jit(conv_lstm2d)
    hidden, cell = conv_lstm2d_jit(x, prev_hidden, prev_cell, w3_f32, bias)
    hidden, cell = jax.block_until_ready((hidden, cell))

    # Sanity check against a plain-JAX f32 reference (bf16 MXU operands in the
    # kernel -> looser tolerance than a pure-f32 comparison).
    ref_hidden, ref_cell = reference_conv_lstm2d(x, prev_hidden, prev_cell,
                                                 w3_f32, bias)
    np.testing.assert_allclose(np.asarray(hidden), np.asarray(ref_hidden),
                               rtol=5e-2, atol=5e-2)
    np.testing.assert_allclose(np.asarray(cell), np.asarray(ref_cell),
                               rtol=5e-2, atol=5e-2)

    print("KERNEL_OK")
</pallas_src>

<mosaic_0001>
module attributes {stable_mosaic.version = 11 : i64} {
  func.func @convlstm_kernel(%arg0: i32, %arg1: memref<1x288x128xbf16, #tpu.memory_space<vmem>>, %arg2: memref<1x256x32xf32, #tpu.memory_space<vmem>>, %arg3: memref<3x128x128xbf16, #tpu.memory_space<vmem>>, %arg4: memref<1x128xf32, #tpu.memory_space<vmem>>, %arg5: memref<1x256x32xf32, #tpu.memory_space<vmem>>, %arg6: memref<1x256x32xf32, #tpu.memory_space<vmem>>) attributes {dimension_semantics = [#tpu.dimension_semantics<parallel>], iteration_bounds = array<i64: 2>, scalar_prefetch = 0 : i64, scratch_operands = 0 : i64, tpu.core_type = #tpu.core_type<tc>, window_params = [{transform_indices = @transform_0, window_bounds = array<i64: 1, 288, 128>}, {transform_indices = @transform_1, window_bounds = array<i64: 1, 256, 32>}, {pipeline_mode = #tpu.pipeline_mode<synchronous>, transform_indices = @transform_2, window_bounds = array<i64: 3, 128, 128>}, {pipeline_mode = #tpu.pipeline_mode<synchronous>, transform_indices = @transform_3, window_bounds = array<i64: 1, 128>}, {transform_indices = @transform_4, window_bounds = array<i64: 1, 256, 32>}, {transform_indices = @transform_5, window_bounds = array<i64: 1, 256, 32>}]} {
    %c0 = arith.constant 0 : index
    %c0_0 = arith.constant 0 : index
    %0 = vector.load %arg4[%c0, %c0_0] : memref<1x128xf32, #tpu.memory_space<vmem>>, vector<1x128xf32>
    %1 = vector.shape_cast %0 : vector<1x128xf32> to vector<1x128xf32>
    %2 = vector.broadcast %1 : vector<1x128xf32> to vector<256x128xf32>
    %c0_1 = arith.constant 0 : index
    %c0_2 = arith.constant 0 : index
    %c0_3 = arith.constant 0 : index
    %3 = vector.load %arg1[%c0_1, %c0_2, %c0_3] : memref<1x288x128xbf16, #tpu.memory_space<vmem>>, vector<1x256x128xbf16>
    %4 = vector.shape_cast %3 : vector<1x256x128xbf16> to vector<256x128xbf16>
    %c0_4 = arith.constant 0 : index
    %c0_5 = arith.constant 0 : index
    %c0_6 = arith.constant 0 : index
    %5 = vector.load %arg3[%c0_4, %c0_5, %c0_6] : memref<3x128x128xbf16, #tpu.memory_space<vmem>>, vector<1x128x128xbf16>
    %6 = vector.shape_cast %5 : vector<1x128x128xbf16> to vector<128x128xbf16>
    %cst = arith.constant dense<0.000000e+00> : vector<256x128xf32>
    %7 = tpu.matmul %4, %6, %cst {dimension_numbers = #tpu.dot_dimension_numbers<[1], [0], [0], [1], [0, 0, 1, 1], [], []>} : vector<256x128xbf16>, vector<128x128xbf16>, vector<256x128xf32> -> vector<256x128xf32>
    %8 = arith.addf %2, %7 : vector<256x128xf32>
    %c0_7 = arith.constant 0 : index
    %c16 = arith.constant 16 : index
    %c0_8 = arith.constant 0 : index
    %9 = vector.load %arg1[%c0_7, %c16, %c0_8] : memref<1x288x128xbf16, #tpu.memory_space<vmem>>, vector<1x256x128xbf16>
    %10 = vector.shape_cast %9 : vector<1x256x128xbf16> to vector<256x128xbf16>
    %c1 = arith.constant 1 : index
    %c0_9 = arith.constant 0 : index
    %c0_10 = arith.constant 0 : index
    %11 = vector.load %arg3[%c1, %c0_9, %c0_10] : memref<3x128x128xbf16, #tpu.memory_space<vmem>>, vector<1x128x128xbf16>
    %12 = vector.shape_cast %11 : vector<1x128x128xbf16> to vector<128x128xbf16>
    %cst_11 = arith.constant dense<0.000000e+00> : vector<256x128xf32>
    %13 = tpu.matmul %10, %12, %cst_11 {dimension_numbers = #tpu.dot_dimension_numbers<[1], [0], [0], [1], [0, 0, 1, 1], [], []>} : vector<256x128xbf16>, vector<128x128xbf16>, vector<256x128xf32> -> vector<256x128xf32>
    %14 = arith.addf %8, %13 : vector<256x128xf32>
    %c0_12 = arith.constant 0 : index
    %c32 = arith.constant 32 : index
    %c0_13 = arith.constant 0 : index
    %15 = vector.load %arg1[%c0_12, %c32, %c0_13] : memref<1x288x128xbf16, #tpu.memory_space<vmem>>, vector<1x256x128xbf16>
    %16 = vector.shape_cast %15 : vector<1x256x128xbf16> to vector<256x128xbf16>
    %c2 = arith.constant 2 : index
    %c0_14 = arith.constant 0 : index
    %c0_15 = arith.constant 0 : index
    %17 = vector.load %arg3[%c2, %c0_14, %c0_15] : memref<3x128x128xbf16, #tpu.memory_space<vmem>>, vector<1x128x128xbf16>
    %18 = vector.shape_cast %17 : vector<1x128x128xbf16> to vector<128x128xbf16>
    %cst_16 = arith.constant dense<0.000000e+00> : vector<256x128xf32>
    %19 = tpu.matmul %16, %18, %cst_16 {dimension_numbers = #tpu.dot_dimension_numbers<[1], [0], [0], [1], [0, 0, 1, 1], [], []>} : vector<256x128xbf16>, vector<128x128xbf16>, vector<256x128xf32> -> vector<256x128xf32>
    %20 = arith.addf %14, %19 : vector<256x128xf32>
    %21 = arith.negf %20 : vector<256x128xf32>
    %22 = math.exp %21 : vector<256x128xf32>
    %cst_17 = arith.constant 1.000000e+00 : f32
    %23 = vector.broadcast %cst_17 : f32 to vector<256x128xf32>
    %24 = arith.addf %23, %22 : vector<256x128xf32>
    %25 = arith.divf %23, %24 : vector<256x128xf32>
    %26 = math.tanh %20 : vector<256x128xf32>
    %27 = vector.extract_strided_slice %25 {offsets = [0, 0], sizes = [256, 32], strides = [1, 1]} : vector<256x128xf32> to vector<256x32xf32>
    %28 = vector.extract_strided_slice %25 {offsets = [0, 32], sizes = [256, 32], strides = [1, 1]} : vector<256x128xf32> to vector<256x32xf32>
    %29 = vector.extract_strided_slice %25 {offsets = [0, 64], sizes = [256, 32], strides = [1, 1]} : vector<256x128xf32> to vector<256x32xf32>
    %30 = vector.extract_strided_slice %26 {offsets = [0, 96], sizes = [256, 32], strides = [1, 1]} : vector<256x128xf32> to vector<256x32xf32>
    %c0_18 = arith.constant 0 : index
    %c0_19 = arith.constant 0 : index
    %c0_20 = arith.constant 0 : index
    %31 = vector.load %arg2[%c0_18, %c0_19, %c0_20] : memref<1x256x32xf32, #tpu.memory_space<vmem>>, vector<1x256x32xf32>
    %32 = vector.shape_cast %31 : vector<1x256x32xf32> to vector<256x32xf32>
    %33 = arith.mulf %28, %32 : vector<256x32xf32>
    %34 = arith.mulf %27, %30 : vector<256x32xf32>
    %35 = arith.addf %33, %34 : vector<256x32xf32>
    %36 = math.tanh %35 : vector<256x32xf32>
    %37 = arith.mulf %29, %36 : vector<256x32xf32>
    %c0_21 = arith.constant 0 : index
    %c0_22 = arith.constant 0 : index
    %c0_23 = arith.constant 0 : index
    %38 = vector.load %arg6[%c0_21, %c0_22, %c0_23] : memref<1x256x32xf32, #tpu.memory_space<vmem>>, vector<1x256x32xf32>
    %39 = vector.shape_cast %38 : vector<1x256x32xf32> to vector<256x32xf32>
    %40 = vector.shape_cast %35 : vector<256x32xf32> to vector<1x256x32xf32>
    tpu.vector_store %arg6[%c0_21, %c0_22, %c0_23], %40 {strides = array<i32>} : memref<1x256x32xf32, #tpu.memory_space<vmem>>, vector<1x256x32xf32>,
    %c0_24 = arith.constant 0 : index
    %c0_25 = arith.constant 0 : index
    %c0_26 = arith.constant 0 : index
    %41 = vector.load %arg5[%c0_24, %c0_25, %c0_26] : memref<1x256x32xf32, #tpu.memory_space<vmem>>, vector<1x256x32xf32>
    %42 = vector.shape_cast %41 : vector<1x256x32xf32> to vector<256x32xf32>
    %43 = vector.shape_cast %37 : vector<256x32xf32> to vector<1x256x32xf32>
    tpu.vector_store %arg5[%c0_24, %c0_25, %c0_26], %43 {strides = array<i32>} : memref<1x256x32xf32, #tpu.memory_space<vmem>>, vector<1x256x32xf32>,
    return
  }
  func.func @transform_0(%arg0: i32) -> (i32, i32, i32) {
    %c0_i32 = arith.constant 0 : i32
    %c0_i32_0 = arith.constant 0 : i32
    %c0_i32_1 = arith.constant 0 : i32
    return %arg0, %c0_i32, %c0_i32_0 : i32, i32, i32
  }
  func.func @transform_1(%arg0: i32) -> (i32, i32, i32) {
    %c0_i32 = arith.constant 0 : i32
    %c0_i32_0 = arith.constant 0 : i32
    %c0_i32_1 = arith.constant 0 : i32
    return %arg0, %c0_i32, %c0_i32_0 : i32, i32, i32
  }
  func.func @transform_2(%arg0: i32) -> (i32, i32, i32) {
    %c0_i32 = arith.constant 0 : i32
    %c0_i32_0 = arith.constant 0 : i32
    %c0_i32_1 = arith.constant 0 : i32
    %c0_i32_2 = arith.constant 0 : i32
    return %c0_i32, %c0_i32_0, %c0_i32_1 : i32, i32, i32
  }
  func.func @transform_3(%arg0: i32) -> (i32, i32) {
    %c0_i32 = arith.constant 0 : i32
    %c0_i32_0 = arith.constant 0 : i32
    %c0_i32_1 = arith.constant 0 : i32
    return %c0_i32, %c0_i32_0 : i32, i32
  }
  func.func @transform_4(%arg0: i32) -> (i32, i32, i32) {
    %c0_i32 = arith.constant 0 : i32
    %c0_i32_0 = arith.constant 0 : i32
    %c0_i32_1 = arith.constant 0 : i32
    return %arg0, %c0_i32, %c0_i32_0 : i32, i32, i32
  }
  func.func @transform_5(%arg0: i32) -> (i32, i32, i32) {
    %c0_i32 = arith.constant 0 : i32
    %c0_i32_0 = arith.constant 0 : i32
    %c0_i32_1 = arith.constant 0 : i32
    return %arg0, %c0_i32, %c0_i32_0 : i32, i32, i32
  }
}

</mosaic_0001>

<llo_original>
// kernel: conv_lstm2d.1
$region0: #{conv_lstm2d.1}
  #allocation0 [shape = 'u32[]', space=smem, size = 0x4, offset = 0x4, fixed_abs, tag = 'smem constant byte address 0x4 - core index']
  #allocation1 [shape = 'u32[72,128]{1,0:T(1,128)}', space=vmem, size = 0x9000, scoped, tag = 'internal scratch']
  %s0 = inlined_call_operand.vmem [shape: bf16[2,288,128], index: 0, kind: input, shape index: {}]
  %s1 = inlined_call_operand.vmem [shape: f32[2,256,32], index: 1, kind: input, shape index: {}]
  %s2 = inlined_call_operand.vmem [shape: bf16[3,128,128], index: 2, kind: input, shape index: {}]
  %s3 = inlined_call_operand.vmem [shape: f32[1,128], index: 3, kind: input, shape index: {}]
  %s4 = inlined_call_operand.hbm [shape: f32[2,256,32], index: 4, kind: output, shape index: {0}]
  %s5 = inlined_call_operand.hbm [shape: f32[2,256,32], index: 5, kind: output, shape index: {1}]
  %6 = xla_tuple %s4, %s5
  %s7 = sld [smem:[#allocation0]]
  $region57: #{conv_lstm2d.1} parent=0
    _
  %s9 = ssub.s32 1, %s7
  %s10 = scalar_select 0, %s9, %s7
  $region1: #{conv_lstm2d.1} parent=0
    #allocation2 [shape = 'u8[262144]{0}', space=vmem, size = 0x40000, scoped, tag = 'output window, operand 0']
    #allocation3 [shape = 's32[2]{0}', space=sflag, size = 0x8, scoped, tag = 'scoped memory for conv_lstm2d.1']
    #allocation4 [shape = 'u8[262144]{0}', space=vmem, size = 0x40000, scoped, tag = 'output window, operand 1']
    #allocation5 [shape = 's32[2]{0}', space=sflag, size = 0x8, scoped, tag = 'scoped memory for conv_lstm2d.1']
    %11 = vsyncpa [#allocation3], 0
    %s12 = scalar_lea.sflag [#allocation3], 1
    %13 = vsyncpa %s12, 0
    %14 = vsyncpa [#allocation5], 0
    %s15 = scalar_lea.sflag [#allocation5], 1
    %16 = vsyncpa %s15, 0
    loop: start=0, step=1, limit=4
    $region2: #{conv_lstm2d.1} parent=1 // loop_pre_header
      _
    $region3: #{conv_lstm2d.1} parent=1 // loop_header
      %s18 = sphi 0, %s22
      %p19 = scmp.ge.s32.totalorder %s18, 4
      %s28 = sphi 0, %s30
      %s31 = sphi 0, %s28
      %s32 = sphi 0, %s31
      %s48 = sphi 0, %s32
      %s54 = sphi 0, %s56
      %s57 = sphi 0, %s54
      %s58 = sphi 0, %s57
      %s74 = sphi 0, %s58
      %s78 = sphi 0, %s78
      %s80 = sphi 0, %s78
      %s81 = sphi 0, %s80
      %s95 = sphi 0, %s81
      %s99 = sphi 0, %s99
      %s101 = sphi 0, %s99
      %s102 = sphi 0, %s101
      %s116 = sphi 0, %s102
      %s122 = sphi 0, %s124
      %s125 = sphi 0, %s122
      %s126 = sphi 0, %s125
      %s142 = sphi 0, %s126
      %s148 = sphi 0, %s150
      %s151 = sphi 0, %s148
      %s152 = sphi 0, %s151
      %s168 = sphi 0, %s152
    $region4: #{conv_lstm2d.1} parent=1 // loop_header_branch
      %21 = sbr.rel (%p19) target = $region8
    $region5: #{conv_lstm2d.1} parent=1 // loop_body
      %s23 = ssub.s32 %s18, 1
      %s24 = ssub.s32 %s18, 2
      %s25 = sadd.s32 %s18, 1
      %s26 = ssub.s32 %s18, %s25
      %p27 = scmp.eq.s32.totalorder %s26, 0
      %s29 = sadd.s32 %s28, 1
      %s30 = scalar_select %p27, %s28, %s29
      %p33 = pneg %p27
      %p34 = scmp.eq.s32.totalorder %s18, 1
      %p35 = por %p33, %p34
      %p36 = scmp.ne.s32.totalorder %s28, %s31
      %p37 = scmp.eq.s32.totalorder %s18, 0
      %p38 = por %p36, %p37
      %p39 = scmp.ne.s32.totalorder %s28, %s31
      %p40 = scmp.eq.s32.totalorder %s23, 1
      %p41 = por %p39, %p40
      %p42 = scmp.ne.s32.totalorder %s31, %s32
      %p43 = scmp.eq.s32.totalorder %s23, 0
      %p44 = por %p42, %p43
      %p45 = scmp.ne.s32.totalorder %s31, %s32
      %p46 = scmp.eq.s32.totalorder %s24, 1
      %p47 = por %p45, %p46
      %p49 = scmp.ne.s32.totalorder %s32, %s48
      %p50 = scmp.eq.s32.totalorder %s24, 0
      %p51 = por %p49, %p50
      %s52 = ssub.s32 %s18, %s25
      %p53 = scmp.eq.s32.totalorder %s52, 0
      %s55 = sadd.s32 %s54, 1
      %s56 = scalar_select %p53, %s54, %s55
      %p59 = pneg %p53
      %p60 = scmp.eq.s32.totalorder %s18, 1
      %p61 = por %p59, %p60
      %p62 = scmp.ne.s32.totalorder %s54, %s57
      %p63 = scmp.eq.s32.totalorder %s18, 0
      %p64 = por %p62, %p63
      %p65 = scmp.ne.s32.totalorder %s54, %s57
      %p66 = scmp.eq.s32.totalorder %s23, 1
      %p67 = por %p65, %p66
      %p68 = scmp.ne.s32.totalorder %s57, %s58
      %p69 = scmp.eq.s32.totalorder %s23, 0
      %p70 = por %p68, %p69
      %p71 = scmp.ne.s32.totalorder %s57, %s58
      %p72 = scmp.eq.s32.totalorder %s24, 1
      %p73 = por %p71, %p72
      %p75 = scmp.ne.s32.totalorder %s58, %s74
      %p76 = scmp.eq.s32.totalorder %s24, 0
      %p77 = por %p75, %p76
      %s79 = sadd.s32 %s78, 1
      %p82 = scmp.eq.s32.totalorder %s18, 1
      %p83 = scmp.ne.s32.totalorder %s78, %s80
      %p84 = scmp.eq.s32.totalorder %s18, 0
      %p85 = por %p83, %p84
      %p86 = scmp.ne.s32.totalorder %s78, %s80
      %p87 = scmp.eq.s32.totalorder %s23, 1
      %p88 = por %p86, %p87
      %p89 = scmp.ne.s32.totalorder %s80, %s81
      %p90 = scmp.eq.s32.totalorder %s23, 0
      %p91 = por %p89, %p90
      %p92 = scmp.ne.s32.totalorder %s80, %s81
      %p93 = scmp.eq.s32.totalorder %s24, 1
      %p94 = por %p92, %p93
      %p96 = scmp.ne.s32.totalorder %s81, %s95
      %p97 = scmp.eq.s32.totalorder %s24, 0
      %p98 = por %p96, %p97
      %s100 = sadd.s32 %s99, 1
      %p103 = scmp.eq.s32.totalorder %s18, 1
      %p104 = scmp.ne.s32.totalorder %s99, %s101
      %p105 = scmp.eq.s32.totalorder %s18, 0
      %p106 = por %p104, %p105
      %p107 = scmp.ne.s32.totalorder %s99, %s101
      %p108 = scmp.eq.s32.totalorder %s23, 1
      %p109 = por %p107, %p108
      %p110 = scmp.ne.s32.totalorder %s101, %s102
      %p111 = scmp.eq.s32.totalorder %s23, 0
      %p112 = por %p110, %p111
      %p113 = scmp.ne.s32.totalorder %s101, %s102
      %p114 = scmp.eq.s32.totalorder %s24, 1
      %p115 = por %p113, %p114
      %p117 = scmp.ne.s32.totalorder %s102, %s116
      %p118 = scmp.eq.s32.totalorder %s24, 0
      %p119 = por %p117, %p118
      %s120 = ssub.s32 %s18, %s25
      %p121 = scmp.eq.s32.totalorder %s120, 0
      %s123 = sadd.s32 %s122, 1
      %s124 = scalar_select %p121, %s122, %s123
      %p127 = pneg %p121
      %p128 = scmp.eq.s32.totalorder %s18, 1
      %p129 = por %p127, %p128
      %p130 = scmp.ne.s32.totalorder %s122, %s125
      %p131 = scmp.eq.s32.totalorder %s18, 0
      %p132 = por %p130, %p131
      %p133 = scmp.ne.s32.totalorder %s122, %s125
      %p134 = scmp.eq.s32.totalorder %s23, 1
      %p135 = por %p133, %p134
      %p136 = scmp.ne.s32.totalorder %s125, %s126
      %p137 = scmp.eq.s32.totalorder %s23, 0
      %p138 = por %p136, %p137
      %p139 = scmp.ne.s32.totalorder %s125, %s126
      %p140 = scmp.eq.s32.totalorder %s24, 1
      %p141 = por %p139, %p140
      %p143 = scmp.ne.s32.totalorder %s126, %s142
      %p144 = scmp.eq.s32.totalorder %s24, 0
      %p145 = por %p143, %p144
      %s146 = ssub.s32 %s18, %s25
      %p147 = scmp.eq.s32.totalorder %s146, 0
      %s149 = sadd.s32 %s148, 1
      %s150 = scalar_select %p147, %s148, %s149
      %p153 = pneg %p147
      %p154 = scmp.eq.s32.totalorder %s18, 1
      %p155 = por %p153, %p154
      %p156 = scmp.ne.s32.totalorder %s148, %s151
      %p157 = scmp.eq.s32.totalorder %s18, 0
      %p158 = por %p156, %p157
      %p159 = scmp.ne.s32.totalorder %s148, %s151
      %p160 = scmp.eq.s32.totalorder %s23, 1
      %p161 = por %p159, %p160
      %p162 = scmp.ne.s32.totalorder %s151, %s152
      %p163 = scmp.eq.s32.totalorder %s23, 0
      %p164 = por %p162, %p163
      %p165 = scmp.ne.s32.totalorder %s151, %s152
      %p166 = scmp.eq.s32.totalorder %s24, 1
      %p167 = por %p165, %p166
      %p169 = scmp.ne.s32.totalorder %s152, %s168
      %p170 = scmp.eq.s32.totalorder %s24, 0
      %p171 = por %p169, %p170
      %p172 = scmp.le.s32.totalorder 1, %s18
      %p173 = scmp.lt.s32.totalorder %s18, 3
      %p174 = pnand %p172, %p173
      %p175 = pneg %p174
      // Predicated region
      $region9: #{conv_lstm2d.1} parent=5 // pred_check
        _
      $region10: #{conv_lstm2d.1} parent=5 // pred_check_branch
        %177 = sbr.rel (%p174) target = $region12
      $region11: #{conv_lstm2d.1} parent=5 // pred_region
        %s178 = ssub.s32 %s18, 1
        // Predicated region
        $region13: #{conv_lstm2d.1} parent=11 // pred_check
          %p179 = pneg %p91
        $region14: #{conv_lstm2d.1} parent=11 // pred_check_branch
          %181 = sbr.rel (%p179) target = $region16
        $region15: #{conv_lstm2d.1} parent=11 // pred_region
          _
        $region16: #{conv_lstm2d.1} parent=11 // pred_fallthru
          _
        // Predicated region
        $region17: #{conv_lstm2d.1} parent=11 // pred_check
          %p182 = pneg %p112
        $region18: #{conv_lstm2d.1} parent=11 // pred_check_branch
          %184 = sbr.rel (%p182) target = $region20
        $region19: #{conv_lstm2d.1} parent=11 // pred_region
          _
        $region20: #{conv_lstm2d.1} parent=11 // pred_fallthru
          _
      $region12: #{conv_lstm2d.1} parent=5 // pred_fallthru
        _
      %p185 = scmp.lt.s32.totalorder %s18, 2
      // Predicated region
      $region21: #{conv_lstm2d.1} parent=5 // pred_check
        %p186 = pneg %p185
      $region22: #{conv_lstm2d.1} parent=5 // pred_check_branch
        %188 = sbr.rel (%p186) target = $region24
      $region23: #{conv_lstm2d.1} parent=5 // pred_region
        // Predicated region
        $region25: #{conv_lstm2d.1} parent=23 // pred_check
          %p189 = pneg %p38
        $region26: #{conv_lstm2d.1} parent=23 // pred_check_branch
          %191 = sbr.rel (%p189) target = $region28
        $region27: #{conv_lstm2d.1} parent=23 // pred_region
          %p192 = scmp.lt.s32.totalorder %s18, 1
          %s193 = scalar_select %p192, %s18, 1
          %s194 = smul.addr %s193, 36
          %s195 = smul.addr %s194, 4
          %s196 = scalar_lea.vmem %s0, %s195
        $region28: #{conv_lstm2d.1} parent=23 // pred_fallthru
          _
        // Predicated region
        $region29: #{conv_lstm2d.1} parent=23 // pred_check
          %p197 = pneg %p64
        $region30: #{conv_lstm2d.1} parent=23 // pred_check_branch
          %199 = sbr.rel (%p197) target = $region32
        $region31: #{conv_lstm2d.1} parent=23 // pred_region
          %p200 = scmp.lt.s32.totalorder %s18, 1
          %s201 = scalar_select %p200, %s18, 1
          %s202 = smul.addr %s201, 32
          %s203 = smul.addr %s202, 8
          %s204 = scalar_lea.vmem %s1, %s203
        $region32: #{conv_lstm2d.1} parent=23 // pred_fallthru
          _
      $region24: #{conv_lstm2d.1} parent=5 // pred_fallthru
        _
      %p205 = scmp.le.s32.totalorder 1, %s18
      %p206 = scmp.lt.s32.totalorder %s18, 3
      %p207 = pnand %p205, %p206
      %p208 = pneg %p207
      // Predicated region
      $region33: #{conv_lstm2d.1} parent=5 // pred_check
        _
      $region34: #{conv_lstm2d.1} parent=5 // pred_check_branch
        %210 = sbr.rel (%p207) target = $region36
      $region35: #{conv_lstm2d.1} parent=5 // pred_region
        %s211 = ssub.s32 %s18, 1
        %p212 = scmp.lt.s32.totalorder %s23, 1
        %s213 = scalar_select %p212, %s23, 1
        %s214 = smul.addr %s213, 36
        %s215 = smul.addr %s214, 4
        %s216 = scalar_lea.vmem %s0, %s215
        %p217 = pneg %p44
        %p218 = pneg %p41
        %p219 = scmp.lt.s32.totalorder %s23, 1
        %s220 = scalar_select %p219, %s23, 1
        %s221 = smul.addr %s220, 32
        %s222 = smul.addr %s221, 8
        %s223 = scalar_lea.vmem %s1, %s222
        %p224 = pneg %p70
        %p225 = pneg %p67
        %p226 = pneg %p91
        %p227 = pneg %p88
        %p228 = pneg %p112
        %p229 = pneg %p109
        %p230 = pneg %p138
        %p231 = pneg %p135
        %s232 = sand.u32 %s125, 1
        %s233 = scalar_lea.sflag [#allocation3], %s232
        %s234 = sand.u32 %s125, 1
        %s235 = smul.addr %s234, 256
        %s236 = scalar_lea.vmem [#allocation2], %s235
        %p237 = pneg %p164
        %p238 = pneg %p161
        %s239 = sand.u32 %s151, 1
        %s240 = scalar_lea.sflag [#allocation5], %s239
        %s241 = sand.u32 %s151, 1
        %s242 = smul.addr %s241, 256
        %s243 = scalar_lea.vmem [#allocation4], %s242
        %p244 = scmp.lt.s32.totalorder %s23, 1
        %s245 = scalar_select %p244, %s23, 1
        %s246 = smul.addr %s245, 36
        %s247 = smul.addr %s246, 4
        %s248 = scalar_lea.vmem %s0, %s247
        %p249 = scmp.lt.s32.totalorder %s23, 1
        %s250 = scalar_select %p249, %s23, 1
        %s251 = smul.addr %s250, 32
        %s252 = smul.addr %s251, 8
        %s253 = scalar_lea.vmem %s1, %s252
        %v254 = vld [vmem:[%s3] sm:$0x1]
        %v256 = vperm.slane %v254, 0
        %v258 = vld [vmem:[%s248] sm:$0xf]
        %v259 = vld [vmem:[%s248 + $0x4] sm:$0xf]
        %v260 = vld [vmem:[%s248 + $0x8] sm:$0xf]
        %v261 = vld [vmem:[%s248 + $0xc] sm:$0xf]
        %v262 = vld [vmem:[%s248 + $0x10] sm:$0xf]
        %v263 = vld [vmem:[%s248 + $0x14] sm:$0xf]
        %v264 = vld [vmem:[%s248 + $0x18] sm:$0xf]
        %v265 = vld [vmem:[%s248 + $0x1c] sm:$0xf]
        %v266 = vld [vmem:[%s248 + $0x20] sm:$0xf]
        %v267 = vld [vmem:[%s248 + $0x24] sm:$0xf]
        %v268 = vld [vmem:[%s248 + $0x28] sm:$0xf]
        %v269 = vld [vmem:[%s248 + $0x2c] sm:$0xf]
        %v270 = vld [vmem:[%s248 + $0x30] sm:$0xf]
        %v271 = vld [vmem:[%s248 + $0x34] sm:$0xf]
        %v272 = vld [vmem:[%s248 + $0x38] sm:$0xf]
        %v273 = vld [vmem:[%s248 + $0x3c] sm:$0xf]
        %v274 = vld [vmem:[%s248 + $0x40] sm:$0xf]
        %v275 = vld [vmem:[%s248 + $0x44] sm:$0xf]
        %v276 = vld [vmem:[%s248 + $0x48] sm:$0xf]
        %v277 = vld [vmem:[%s248 + $0x4c] sm:$0xf]
        %v278 = vld [vmem:[%s248 + $0x50] sm:$0xf]
        %v279 = vld [vmem:[%s248 + $0x54] sm:$0xf]
        %v280 = vld [vmem:[%s248 + $0x58] sm:$0xf]
        %v281 = vld [vmem:[%s248 + $0x5c] sm:$0xf]
        %v282 = vld [vmem:[%s248 + $0x60] sm:$0xf]
        %v283 = vld [vmem:[%s248 + $0x64] sm:$0xf]
        %v284 = vld [vmem:[%s248 + $0x68] sm:$0xf]
        %v285 = vld [vmem:[%s248 + $0x6c] sm:$0xf]
        %v286 = vld [vmem:[%s248 + $0x70] sm:$0xf]
        %v287 = vld [vmem:[%s248 + $0x74] sm:$0xf]
        %v288 = vld [vmem:[%s248 + $0x78] sm:$0xf]
        %v289 = vld [vmem:[%s248 + $0x7c] sm:$0xf]
        %v290 = vld [vmem:[%s2] sm:$0xf]
        %v291 = vld [vmem:[%s2 + $0x4] sm:$0xf]
        %v292 = vld [vmem:[%s2 + $0x8] sm:$0xf]
        %v293 = vld [vmem:[%s2 + $0xc] sm:$0xf]
        %v294 = vld [vmem:[%s2 + $0x10] sm:$0xf]
        %v295 = vld [vmem:[%s2 + $0x14] sm:$0xf]
        %v296 = vld [vmem:[%s2 + $0x18] sm:$0xf]
        %v297 = vld [vmem:[%s2 + $0x1c] sm:$0xf]
        %v298 = vld [vmem:[%s2 + $0x20] sm:$0xf]
        %v299 = vld [vmem:[%s2 + $0x24] sm:$0xf]
        %v300 = vld [vmem:[%s2 + $0x28] sm:$0xf]
        %v301 = vld [vmem:[%s2 + $0x2c] sm:$0xf]
        %v302 = vld [vmem:[%s2 + $0x30] sm:$0xf]
        %v303 = vld [vmem:[%s2 + $0x34] sm:$0xf]
        %v304 = vld [vmem:[%s2 + $0x38] sm:$0xf]
        %v305 = vld [vmem:[%s2 + $0x3c] sm:$0xf]
        %v338 = vunpack.c.l.b16 %v258
        %v339 = vunpack.c.l.b16 %v259
        %v340 = vunpack.c.l.b16 %v260
        %v341 = vunpack.c.l.b16 %v261
        %v342 = vunpack.c.l.b16 %v262
        %v343 = vunpack.c.l.b16 %v263
        %v344 = vunpack.c.l.b16 %v264
        %v345 = vunpack.c.l.b16 %v265
        %v346 = vunpack.c.l.b16 %v266
        %v347 = vunpack.c.l.b16 %v267
        %v348 = vunpack.c.l.b16 %v268
        %v349 = vunpack.c.l.b16 %v269
        %v350 = vunpack.c.l.b16 %v270
        %v351 = vunpack.c.l.b16 %v271
        %v352 = vunpack.c.l.b16 %v272
        %v353 = vunpack.c.l.b16 %v273
        %v354 = vunpack.c.l.b16 %v274
        %v355 = vunpack.c.l.b16 %v275
        %v356 = vunpack.c.l.b16 %v276
        %v357 = vunpack.c.l.b16 %v277
        %v358 = vunpack.c.l.b16 %v278
        %v359 = vunpack.c.l.b16 %v279
        %v360 = vunpack.c.l.b16 %v280
        %v361 = vunpack.c.l.b16 %v281
        %v362 = vunpack.c.l.b16 %v282
        %v363 = vunpack.c.l.b16 %v283
        %v364 = vunpack.c.l.b16 %v284
        %v365 = vunpack.c.l.b16 %v285
        %v366 = vunpack.c.l.b16 %v286
        %v367 = vunpack.c.l.b16 %v287
        %v368 = vunpack.c.l.b16 %v288
        %v369 = vunpack.c.l.b16 %v289
        %v370 = vpack.c.b16 %v339, %v338
        %v371 = vpack.c.b16 %v341, %v340
        %v372 = vpack.c.b16 %v343, %v342
        %v373 = vpack.c.b16 %v345, %v344
        %v374 = vpack.c.b16 %v347, %v346
        %v375 = vpack.c.b16 %v349, %v348
        %v376 = vpack.c.b16 %v351, %v350
        %v377 = vpack.c.b16 %v353, %v352
        %v378 = vpack.c.b16 %v355, %v354
        %v379 = vpack.c.b16 %v357, %v356
        %v380 = vpack.c.b16 %v359, %v358
        %v381 = vpack.c.b16 %v361, %v360
        %v382 = vpack.c.b16 %v363, %v362
        %v383 = vpack.c.b16 %v365, %v364
        %v384 = vpack.c.b16 %v367, %v366
        %v385 = vpack.c.b16 %v369, %v368
        %v418 = vunpack.c.l.b16 %v290
        %v419 = vunpack.c.l.b16 %v291
        %v420 = vunpack.c.l.b16 %v292
        %v421 = vunpack.c.l.b16 %v293
        %v422 = vunpack.c.l.b16 %v294
        %v423 = vunpack.c.l.b16 %v295
        %v424 = vunpack.c.l.b16 %v296
        %v425 = vunpack.c.l.b16 %v297
        %v426 = vunpack.c.l.b16 %v298
        %v427 = vunpack.c.l.b16 %v299
        %v428 = vunpack.c.l.b16 %v300
        %v429 = vunpack.c.l.b16 %v301
        %v430 = vunpack.c.l.b16 %v302
        %v431 = vunpack.c.l.b16 %v303
        %v432 = vunpack.c.l.b16 %v304
        %v433 = vunpack.c.l.b16 %v305
        %v434 = vpack.c.b16 %v419, %v418
        %v435 = vpack.c.b16 %v421, %v420
        %v436 = vpack.c.b16 %v423, %v422
        %v437 = vpack.c.b16 %v425, %v424
        %v438 = vpack.c.b16 %v427, %v426
        %v439 = vpack.c.b16 %v429, %v428
        %v440 = vpack.c.b16 %v431, %v430
        %v441 = vpack.c.b16 %v433, %v432
        %450 = vmatpush.bf16.msra.mxu0 %v441
        %451 = vmatpush.bf16.msra.mxu0 %v440
        %452 = vmatpush.bf16.msra.mxu0 %v439
        %453 = vmatpush.bf16.msra.mxu0 %v438
        %454 = vmatpush.bf16.msra.mxu0 %v437
        %455 = vmatpush.bf16.msra.mxu0 %v436
        %456 = vmatpush.bf16.msra.mxu0 %v435
        %457 = vmatpush.bf16.msra.mxu0 %v434
        %458 = vmatmul.bf16.gmra.mxu0 %v370
        %v459 = vpop.f32.mrf.mxu0
        %v460 = vadd.f32 0.0, %v459
        %v461 = vpop.f32.mrf.mxu0
        %v462 = vadd.f32 0.0, %v461
        %463 = vmatmul.bf16.gmra.mxu0 %v371
        %v464 = vpop.f32.mrf.mxu0
        %v465 = vadd.f32 0.0, %v464
        %v466 = vpop.f32.mrf.mxu0
        %v467 = vadd.f32 0.0, %v466
        %468 = vmatmul.bf16.gmra.mxu0 %v372
        %v469 = vpop.f32.mrf.mxu0
        %v470 = vadd.f32 0.0, %v469
        %v471 = vpop.f32.mrf.mxu0
        %v472 = vadd.f32 0.0, %v471
        %473 = vmatmul.bf16.gmra.mxu0 %v373
        %v474 = vpop.f32.mrf.mxu0
        %v475 = vadd.f32 0.0, %v474
        %v476 = vpop.f32.mrf.mxu0
        %v477 = vadd.f32 0.0, %v476
        %478 = vmatmul.bf16.gmra.mxu0 %v374
        %v479 = vpop.f32.mrf.mxu0
        %v480 = vadd.f32 0.0, %v479
        %v481 = vpop.f32.mrf.mxu0
        %v482 = vadd.f32 0.0, %v481
        %483 = vmatmul.bf16.gmra.mxu0 %v375
        %v484 = vpop.f32.mrf.mxu0
        %v485 = vadd.f32 0.0, %v484
        %v486 = vpop.f32.mrf.mxu0
        %v487 = vadd.f32 0.0, %v486
        %488 = vmatmul.bf16.gmra.mxu0 %v376
        %v489 = vpop.f32.mrf.mxu0
        %v490 = vadd.f32 0.0, %v489
        %v491 = vpop.f32.mrf.mxu0
        %v492 = vadd.f32 0.0, %v491
        %493 = vmatmul.bf16.gmra.mxu0 %v377
        %v494 = vpop.f32.mrf.mxu0
        %v495 = vadd.f32 0.0, %v494
        %v496 = vpop.f32.mrf.mxu0
        %v497 = vadd.f32 0.0, %v496
        %498 = vmatmul.bf16.gmra.mxu0 %v378
        %v499 = vpop.f32.mrf.mxu0
        %v500 = vadd.f32 0.0, %v499
        %v501 = vpop.f32.mrf.mxu0
        %v502 = vadd.f32 0.0, %v501
        %503 = vmatmul.bf16.gmra.mxu0 %v379
        %v504 = vpop.f32.mrf.mxu0
        %v505 = vadd.f32 0.0, %v504
        %v506 = vpop.f32.mrf.mxu0
        %v507 = vadd.f32 0.0, %v506
        %508 = vmatmul.bf16.gmra.mxu0 %v380
        %v509 = vpop.f32.mrf.mxu0
        %v510 = vadd.f32 0.0, %v509
        %v511 = vpop.f32.mrf.mxu0
        %v512 = vadd.f32 0.0, %v511
        %513 = vmatmul.bf16.gmra.mxu0 %v381
        %v514 = vpop.f32.mrf.mxu0
        %v515 = vadd.f32 0.0, %v514
        %v516 = vpop.f32.mrf.mxu0
        %v517 = vadd.f32 0.0, %v516
        %518 = vmatmul.bf16.gmra.mxu0 %v382
        %v519 = vpop.f32.mrf.mxu0
        %v520 = vadd.f32 0.0, %v519
        %v521 = vpop.f32.mrf.mxu0
        %v522 = vadd.f32 0.0, %v521
        %523 = vmatmul.bf16.gmra.mxu0 %v383
        %v524 = vpop.f32.mrf.mxu0
        %v525 = vadd.f32 0.0, %v524
        %v526 = vpop.f32.mrf.mxu0
        %v527 = vadd.f32 0.0, %v526
        %528 = vmatmul.bf16.gmra.mxu0 %v384
        %v529 = vpop.f32.mrf.mxu0
        %v530 = vadd.f32 0.0, %v529
        %v531 = vpop.f32.mrf.mxu0
        %v532 = vadd.f32 0.0, %v531
        %533 = vmatmul.bf16.gmra.mxu0 %v385
        %v534 = vpop.f32.mrf.mxu0
        %v535 = vadd.f32 0.0, %v534
        %v536 = vpop.f32.mrf.mxu0
        %v537 = vadd.f32 0.0, %v536
        %538 = vdwg.mxu0
        %v539 = vadd.f32 %v256, %v460
        %v540 = vadd.f32 %v256, %v462
        %v541 = vadd.f32 %v256, %v465
        %v542 = vadd.f32 %v256, %v467
        %v543 = vadd.f32 %v256, %v470
        %v544 = vadd.f32 %v256, %v472
        %v545 = vadd.f32 %v256, %v475
        %v546 = vadd.f32 %v256, %v477
        %v547 = vadd.f32 %v256, %v480
        %v548 = vadd.f32 %v256, %v482
        %v549 = vadd.f32 %v256, %v485
        %v550 = vadd.f32 %v256, %v487
        %v551 = vadd.f32 %v256, %v490
        %v552 = vadd.f32 %v256, %v492
        %v553 = vadd.f32 %v256, %v495
        %v554 = vadd.f32 %v256, %v497
        %v555 = vadd.f32 %v256, %v500
        %v556 = vadd.f32 %v256, %v502
        %v557 = vadd.f32 %v256, %v505
        %v558 = vadd.f32 %v256, %v507
        %v559 = vadd.f32 %v256, %v510
        %v560 = vadd.f32 %v256, %v512
        %v561 = vadd.f32 %v256, %v515
        %v562 = vadd.f32 %v256, %v517
        %v563 = vadd.f32 %v256, %v520
        %v564 = vadd.f32 %v256, %v522
        %v565 = vadd.f32 %v256, %v525
        %v566 = vadd.f32 %v256, %v527
        %v567 = vadd.f32 %v256, %v530
        %v568 = vadd.f32 %v256, %v532
        %v569 = vadd.f32 %v256, %v535
        %v570 = vadd.f32 %v256, %v537
        %v571 = vld [vmem:[%s248 + $0x8] sm:$0xf]
        %v572 = vld [vmem:[%s248 + $0xc] sm:$0xf]
        %v573 = vld [vmem:[%s248 + $0x10] sm:$0xf]
        %v574 = vld [vmem:[%s248 + $0x14] sm:$0xf]
        %v575 = vld [vmem:[%s248 + $0x18] sm:$0xf]
        %v576 = vld [vmem:[%s248 + $0x1c] sm:$0xf]
        %v577 = vld [vmem:[%s248 + $0x20] sm:$0xf]
        %v578 = vld [vmem:[%s248 + $0x24] sm:$0xf]
        %v579 = vld [vmem:[%s248 + $0x28] sm:$0xf]
        %v580 = vld [vmem:[%s248 + $0x2c] sm:$0xf]
        %v581 = vld [vmem:[%s248 + $0x30] sm:$0xf]
        %v582 = vld [vmem:[%s248 + $0x34] sm:$0xf]
        %v583 = vld [vmem:[%s248 + $0x38] sm:$0xf]
        %v584 = vld [vmem:[%s248 + $0x3c] sm:$0xf]
        %v585 = vld [vmem:[%s248 + $0x40] sm:$0xf]
        %v586 = vld [vmem:[%s248 + $0x44] sm:$0xf]
        %v587 = vld [vmem:[%s248 + $0x48] sm:$0xf]
        %v588 = vld [vmem:[%s248 + $0x4c] sm:$0xf]
        %v589 = vld [vmem:[%s248 + $0x50] sm:$0xf]
        %v590 = vld [vmem:[%s248 + $0x54] sm:$0xf]
        %v591 = vld [vmem:[%s248 + $0x58] sm:$0xf]
        %v592 = vld [vmem:[%s248 + $0x5c] sm:$0xf]
        %v593 = vld [vmem:[%s248 + $0x60] sm:$0xf]
        %v594 = vld [vmem:[%s248 + $0x64] sm:$0xf]
        %v595 = vld [vmem:[%s248 + $0x68] sm:$0xf]
        %v596 = vld [vmem:[%s248 + $0x6c] sm:$0xf]
        %v597 = vld [vmem:[%s248 + $0x70] sm:$0xf]
        %v598 = vld [vmem:[%s248 + $0x74] sm:$0xf]
        %v599 = vld [vmem:[%s248 + $0x78] sm:$0xf]
        %v600 = vld [vmem:[%s248 + $0x7c] sm:$0xf]
        %v601 = vld [vmem:[%s248 + $0x80] sm:$0xf]
        %v602 = vld [vmem:[%s248 + $0x84] sm:$0xf]
        %s603 = scalar_lea.vmem %s2, 64
        %v604 = vld [vmem:[%s603] sm:$0xf]
        %v605 = vld [vmem:[%s603 + $0x4] sm:$0xf]
        %v606 = vld [vmem:[%s603 + $0x8] sm:$0xf]
        %v607 = vld [vmem:[%s603 + $0xc] sm:$0xf]
        %v608 = vld [vmem:[%s603 + $0x10] sm:$0xf]
        %v609 = vld [vmem:[%s603 + $0x14] sm:$0xf]
        %v610 = vld [vmem:[%s603 + $0x18] sm:$0xf]
        %v611 = vld [vmem:[%s603 + $0x1c] sm:$0xf]
        %v612 = vld [vmem:[%s603 + $0x20] sm:$0xf]
        %v613 = vld [vmem:[%s603 + $0x24] sm:$0xf]
        %v614 = vld [vmem:[%s603 + $0x28] sm:$0xf]
        %v615 = vld [vmem:[%s603 + $0x2c] sm:$0xf]
        %v616 = vld [vmem:[%s603 + $0x30] sm:$0xf]
        %v617 = vld [vmem:[%s603 + $0x34] sm:$0xf]
        %v618 = vld [vmem:[%s603 + $0x38] sm:$0xf]
        %v619 = vld [vmem:[%s603 + $0x3c] sm:$0xf]
        %v652 = vunpack.c.l.b16 %v571
        %v653 = vunpack.c.l.b16 %v572
        %v654 = vunpack.c.l.b16 %v573
        %v655 = vunpack.c.l.b16 %v574
        %v656 = vunpack.c.l.b16 %v575
        %v657 = vunpack.c.l.b16 %v576
        %v658 = vunpack.c.l.b16 %v577
        %v659 = vunpack.c.l.b16 %v578
        %v660 = vunpack.c.l.b16 %v579
        %v661 = vunpack.c.l.b16 %v580
        %v662 = vunpack.c.l.b16 %v581
        %v663 = vunpack.c.l.b16 %v582
        %v664 = vunpack.c.l.b16 %v583
        %v665 = vunpack.c.l.b16 %v584
        %v666 = vunpack.c.l.b16 %v585
        %v667 = vunpack.c.l.b16 %v586
        %v668 = vunpack.c.l.b16 %v587
        %v669 = vunpack.c.l.b16 %v588
        %v670 = vunpack.c.l.b16 %v589
        %v671 = vunpack.c.l.b16 %v590
        %v672 = vunpack.c.l.b16 %v591
        %v673 = vunpack.c.l.b16 %v592
        %v674 = vunpack.c.l.b16 %v593
        %v675 = vunpack.c.l.b16 %v594
        %v676 = vunpack.c.l.b16 %v595
        %v677 = vunpack.c.l.b16 %v596
        %v678 = vunpack.c.l.b16 %v597
        %v679 = vunpack.c.l.b16 %v598
        %v680 = vunpack.c.l.b16 %v599
        %v681 = vunpack.c.l.b16 %v600
        %v682 = vunpack.c.l.b16 %v601
        %v683 = vunpack.c.l.b16 %v602
        %v684 = vpack.c.b16 %v653, %v652
        %v685 = vpack.c.b16 %v655, %v654
        %v686 = vpack.c.b16 %v657, %v656
        %v687 = vpack.c.b16 %v659, %v658
        %v688 = vpack.c.b16 %v661, %v660
        %v689 = vpack.c.b16 %v663, %v662
        %v690 = vpack.c.b16 %v665, %v664
        %v691 = vpack.c.b16 %v667, %v666
        %v692 = vpack.c.b16 %v669, %v668
        %v693 = vpack.c.b16 %v671, %v670
        %v694 = vpack.c.b16 %v673, %v672
        %v695 = vpack.c.b16 %v675, %v674
        %v696 = vpack.c.b16 %v677, %v676
        %v697 = vpack.c.b16 %v679, %v678
        %v698 = vpack.c.b16 %v681, %v680
        %v699 = vpack.c.b16 %v683, %v682
        %v732 = vunpack.c.l.b16 %v604
        %v733 = vunpack.c.l.b16 %v605
        %v734 = vunpack.c.l.b16 %v606
        %v735 = vunpack.c.l.b16 %v607
        %v736 = vunpack.c.l.b16 %v608
        %v737 = vunpack.c.l.b16 %v609
        %v738 = vunpack.c.l.b16 %v610
        %v739 = vunpack.c.l.b16 %v611
        %v740 = vunpack.c.l.b16 %v612
        %v741 = vunpack.c.l.b16 %v613
        %v742 = vunpack.c.l.b16 %v614
        %v743 = vunpack.c.l.b16 %v615
        %v744 = vunpack.c.l.b16 %v616
        %v745 = vunpack.c.l.b16 %v617
        %v746 = vunpack.c.l.b16 %v618
        %v747 = vunpack.c.l.b16 %v619
        %v748 = vpack.c.b16 %v733, %v732
        %v749 = vpack.c.b16 %v735, %v734
        %v750 = vpack.c.b16 %v737, %v736
        %v751 = vpack.c.b16 %v739, %v738
        %v752 = vpack.c.b16 %v741, %v740
        %v753 = vpack.c.b16 %v743, %v742
        %v754 = vpack.c.b16 %v745, %v744
        %v755 = vpack.c.b16 %v747, %v746
        %764 = vmatpush.bf16.msra.mxu0 %v755
        %765 = vmatpush.bf16.msra.mxu0 %v754
        %766 = vmatpush.bf16.msra.mxu0 %v753
        %767 = vmatpush.bf16.msra.mxu0 %v752
        %768 = vmatpush.bf16.msra.mxu0 %v751
        %769 = vmatpush.bf16.msra.mxu0 %v750
        %770 = vmatpush.bf16.msra.mxu0 %v749
        %771 = vmatpush.bf16.msra.mxu0 %v748
        %772 = vmatmul.bf16.gmra.mxu0 %v684
        %v773 = vpop.f32.mrf.mxu0
        %v774 = vadd.f32 0.0, %v773
        %v775 = vpop.f32.mrf.mxu0
        %v776 = vadd.f32 0.0, %v775
        %777 = vmatmul.bf16.gmra.mxu0 %v685
        %v778 = vpop.f32.mrf.mxu0
        %v779 = vadd.f32 0.0, %v778
        %v780 = vpop.f32.mrf.mxu0
        %v781 = vadd.f32 0.0, %v780
        %782 = vmatmul.bf16.gmra.mxu0 %v686
        %v783 = vpop.f32.mrf.mxu0
        %v784 = vadd.f32 0.0, %v783
        %v785 = vpop.f32.mrf.mxu0
        %v786 = vadd.f32 0.0, %v785
        %787 = vmatmul.bf16.gmra.mxu0 %v687
        %v788 = vpop.f32.mrf.mxu0
        %v789 = vadd.f32 0.0, %v788
        %v790 = vpop.f32.mrf.mxu0
        %v791 = vadd.f32 0.0, %v790
        %792 = vmatmul.bf16.gmra.mxu0 %v688
        %v793 = vpop.f32.mrf.mxu0
        %v794 = vadd.f32 0.0, %v793
        %v795 = vpop.f32.mrf.mxu0
        %v796 = vadd.f32 0.0, %v795
        %797 = vmatmul.bf16.gmra.mxu0 %v689
        %v798 = vpop.f32.mrf.mxu0
        %v799 = vadd.f32 0.0, %v798
        %v800 = vpop.f32.mrf.mxu0
        %v801 = vadd.f32 0.0, %v800
        %802 = vmatmul.bf16.gmra.mxu0 %v690
        %v803 = vpop.f32.mrf.mxu0
        %v804 = vadd.f32 0.0, %v803
        %v805 = vpop.f32.mrf.mxu0
        %v806 = vadd.f32 0.0, %v805
        %807 = vmatmul.bf16.gmra.mxu0 %v691
        %v808 = vpop.f32.mrf.mxu0
        %v809 = vadd.f32 0.0, %v808
        %v810 = vpop.f32.mrf.mxu0
        %v811 = vadd.f32 0.0, %v810
        %812 = vmatmul.bf16.gmra.mxu0 %v692
        %v813 = vpop.f32.mrf.mxu0
        %v814 = vadd.f32 0.0, %v813
        %v815 = vpop.f32.mrf.mxu0
        %v816 = vadd.f32 0.0, %v815
        %817 = vmatmul.bf16.gmra.mxu0 %v693
        %v818 = vpop.f32.mrf.mxu0
        %v819 = vadd.f32 0.0, %v818
        %v820 = vpop.f32.mrf.mxu0
        %v821 = vadd.f32 0.0, %v820
        %822 = vmatmul.bf16.gmra.mxu0 %v694
        %v823 = vpop.f32.mrf.mxu0
        %v824 = vadd.f32 0.0, %v823
        %v825 = vpop.f32.mrf.mxu0
        %v826 = vadd.f32 0.0, %v825
        %827 = vmatmul.bf16.gmra.mxu0 %v695
        %v828 = vpop.f32.mrf.mxu0
        %v829 = vadd.f32 0.0, %v828
        %v830 = vpop.f32.mrf.mxu0
        %v831 = vadd.f32 0.0, %v830
        %832 = vmatmul.bf16.gmra.mxu0 %v696
        %v833 = vpop.f32.mrf.mxu0
        %v834 = vadd.f32 0.0, %v833
        %v835 = vpop.f32.mrf.mxu0
        %v836 = vadd.f32 0.0, %v835
        %837 = vmatmul.bf16.gmra.mxu0 %v697
        %v838 = vpop.f32.mrf.mxu0
        %v839 = vadd.f32 0.0, %v838
        %v840 = vpop.f32.mrf.mxu0
        %v841 = vadd.f32 0.0, %v840
        %842 = vmatmul.bf16.gmra.mxu0 %v698
        %v843 = vpop.f32.mrf.mxu0
        %v844 = vadd.f32 0.0, %v843
        %v845 = vpop.f32.mrf.mxu0
        %v846 = vadd.f32 0.0, %v845
        %847 = vmatmul.bf16.gmra.mxu0 %v699
        %v848 = vpop.f32.mrf.mxu0
        %v849 = vadd.f32 0.0, %v848
        %v850 = vpop.f32.mrf.mxu0
        %v851 = vadd.f32 0.0, %v850
        %852 = vdwg.mxu0
        %v853 = vadd.f32 %v539, %v774
        %v854 = vadd.f32 %v540, %v776
        %v855 = vadd.f32 %v541, %v779
        %v856 = vadd.f32 %v542, %v781
        %v857 = vadd.f32 %v543, %v784
        %v858 = vadd.f32 %v544, %v786
        %v859 = vadd.f32 %v545, %v789
        %v860 = vadd.f32 %v546, %v791
        %v861 = vadd.f32 %v547, %v794
        %v862 = vadd.f32 %v548, %v796
        %v863 = vadd.f32 %v549, %v799
        %v864 = vadd.f32 %v550, %v801
        %v865 = vadd.f32 %v551, %v804
        %v866 = vadd.f32 %v552, %v806
        %v867 = vadd.f32 %v553, %v809
        %v868 = vadd.f32 %v554, %v811
        %v869 = vadd.f32 %v555, %v814
        %v870 = vadd.f32 %v556, %v816
        %v871 = vadd.f32 %v557, %v819
        %v872 = vadd.f32 %v558, %v821
        %v873 = vadd.f32 %v559, %v824
        %v874 = vadd.f32 %v560, %v826
        %v875 = vadd.f32 %v561, %v829
        %v876 = vadd.f32 %v562, %v831
        %v877 = vadd.f32 %v563, %v834
        %v878 = vadd.f32 %v564, %v836
        %v879 = vadd.f32 %v565, %v839
        %v880 = vadd.f32 %v566, %v841
        %v881 = vadd.f32 %v567, %v844
        %v882 = vadd.f32 %v568, %v846
        %v883 = vadd.f32 %v569, %v849
        %v884 = vadd.f32 %v570, %v851
        %v885 = vld [vmem:[%s248 + $0x10] sm:$0xf]
        %v886 = vld [vmem:[%s248 + $0x14] sm:$0xf]
        %v887 = vld [vmem:[%s248 + $0x18] sm:$0xf]
        %v888 = vld [vmem:[%s248 + $0x1c] sm:$0xf]
        %v889 = vld [vmem:[%s248 + $0x20] sm:$0xf]
        %v890 = vld [vmem:[%s248 + $0x24] sm:$0xf]
        %v891 = vld [vmem:[%s248 + $0x28] sm:$0xf]
        %v892 = vld [vmem:[%s248 + $0x2c] sm:$0xf]
        %v893 = vld [vmem:[%s248 + $0x30] sm:$0xf]
        %v894 = vld [vmem:[%s248 + $0x34] sm:$0xf]
        %v895 = vld [vmem:[%s248 + $0x38] sm:$0xf]
        %v896 = vld [vmem:[%s248 + $0x3c] sm:$0xf]
        %v897 = vld [vmem:[%s248 + $0x40] sm:$0xf]
        %v898 = vld [vmem:[%s248 + $0x44] sm:$0xf]
        %v899 = vld [vmem:[%s248 + $0x48] sm:$0xf]
        %v900 = vld [vmem:[%s248 + $0x4c] sm:$0xf]
        %v901 = vld [vmem:[%s248 + $0x50] sm:$0xf]
        %v902 = vld [vmem:[%s248 + $0x54] sm:$0xf]
        %v903 = vld [vmem:[%s248 + $0x58] sm:$0xf]
        %v904 = vld [vmem:[%s248 + $0x5c] sm:$0xf]
        %v905 = vld [vmem:[%s248 + $0x60] sm:$0xf]
        %v906 = vld [vmem:[%s248 + $0x64] sm:$0xf]
        %v907 = vld [vmem:[%s248 + $0x68] sm:$0xf]
        %v908 = vld [vmem:[%s248 + $0x6c] sm:$0xf]
        %v909 = vld [vmem:[%s248 + $0x70] sm:$0xf]
        %v910 = vld [vmem:[%s248 + $0x74] sm:$0xf]
        %v911 = vld [vmem:[%s248 + $0x78] sm:$0xf]
        %v912 = vld [vmem:[%s248 + $0x7c] sm:$0xf]
        %v913 = vld [vmem:[%s248 + $0x80] sm:$0xf]
        %v914 = vld [vmem:[%s248 + $0x84] sm:$0xf]
        %v915 = vld [vmem:[%s248 + $0x88] sm:$0xf]
        %v916 = vld [vmem:[%s248 + $0x8c] sm:$0xf]
        %s917 = scalar_lea.vmem %s2, 128
        %v918 = vld [vmem:[%s917] sm:$0xf]
        %v919 = vld [vmem:[%s917 + $0x4] sm:$0xf]
        %v920 = vld [vmem:[%s917 + $0x8] sm:$0xf]
        %v921 = vld [vmem:[%s917 + $0xc] sm:$0xf]
        %v922 = vld [vmem:[%s917 + $0x10] sm:$0xf]
        %v923 = vld [vmem:[%s917 + $0x14] sm:$0xf]
        %v924 = vld [vmem:[%s917 + $0x18] sm:$0xf]
        %v925 = vld [vmem:[%s917 + $0x1c] sm:$0xf]
        %v926 = vld [vmem:[%s917 + $0x20] sm:$0xf]
        %v927 = vld [vmem:[%s917 + $0x24] sm:$0xf]
        %v928 = vld [vmem:[%s917 + $0x28] sm:$0xf]
        %v929 = vld [vmem:[%s917 + $0x2c] sm:$0xf]
        %v930 = vld [vmem:[%s917 + $0x30] sm:$0xf]
        %v931 = vld [vmem:[%s917 + $0x34] sm:$0xf]
        %v932 = vld [vmem:[%s917 + $0x38] sm:$0xf]
        %v933 = vld [vmem:[%s917 + $0x3c] sm:$0xf]
        %v966 = vunpack.c.l.b16 %v885
        %v967 = vunpack.c.l.b16 %v886
        %v968 = vunpack.c.l.b16 %v887
        %v969 = vunpack.c.l.b16 %v888
        %v970 = vunpack.c.l.b16 %v889
        %v971 = vunpack.c.l.b16 %v890
        %v972 = vunpack.c.l.b16 %v891
        %v973 = vunpack.c.l.b16 %v892
        %v974 = vunpack.c.l.b16 %v893
        %v975 = vunpack.c.l.b16 %v894
        %v976 = vunpack.c.l.b16 %v895
        %v977 = vunpack.c.l.b16 %v896
        %v978 = vunpack.c.l.b16 %v897
        %v979 = vunpack.c.l.b16 %v898
        %v980 = vunpack.c.l.b16 %v899
        %v981 = vunpack.c.l.b16 %v900
        %v982 = vunpack.c.l.b16 %v901
        %v983 = vunpack.c.l.b16 %v902
        %v984 = vunpack.c.l.b16 %v903
        %v985 = vunpack.c.l.b16 %v904
        %v986 = vunpack.c.l.b16 %v905
        %v987 = vunpack.c.l.b16 %v906
        %v988 = vunpack.c.l.b16 %v907
        %v989 = vunpack.c.l.b16 %v908
        %v990 = vunpack.c.l.b16 %v909
        %v991 = vunpack.c.l.b16 %v910
        %v992 = vunpack.c.l.b16 %v911
        %v993 = vunpack.c.l.b16 %v912
        %v994 = vunpack.c.l.b16 %v913
        %v995 = vunpack.c.l.b16 %v914
        %v996 = vunpack.c.l.b16 %v915
        %v997 = vunpack.c.l.b16 %v916
        %v998 = vpack.c.b16 %v967, %v966
        %v999 = vpack.c.b16 %v969, %v968
        %v1000 = vpack.c.b16 %v971, %v970
        %v1001 = vpack.c.b16 %v973, %v972
        %v1002 = vpack.c.b16 %v975, %v974
        %v1003 = vpack.c.b16 %v977, %v976
        %v1004 = vpack.c.b16 %v979, %v978
        %v1005 = vpack.c.b16 %v981, %v980
        %v1006 = vpack.c.b16 %v983, %v982
        %v1007 = vpack.c.b16 %v985, %v984
        %v1008 = vpack.c.b16 %v987, %v986
        %v1009 = vpack.c.b16 %v989, %v988
        %v1010 = vpack.c.b16 %v991, %v990
        %v1011 = vpack.c.b16 %v993, %v992
        %v1012 = vpack.c.b16 %v995, %v994
        %v1013 = vpack.c.b16 %v997, %v996
        %v1046 = vunpack.c.l.b16 %v918
        %v1047 = vunpack.c.l.b16 %v919
        %v1048 = vunpack.c.l.b16 %v920
        %v1049 = vunpack.c.l.b16 %v921
        %v1050 = vunpack.c.l.b16 %v922
        %v1051 = vunpack.c.l.b16 %v923
        %v1052 = vunpack.c.l.b16 %v924
        %v1053 = vunpack.c.l.b16 %v925
        %v1054 = vunpack.c.l.b16 %v926
        %v1055 = vunpack.c.l.b16 %v927
        %v1056 = vunpack.c.l.b16 %v928
        %v1057 = vunpack.c.l.b16 %v929
        %v1058 = vunpack.c.l.b16 %v930
        %v1059 = vunpack.c.l.b16 %v931
        %v1060 = vunpack.c.l.b16 %v932
        %v1061 = vunpack.c.l.b16 %v933
        %v1062 = vpack.c.b16 %v1047, %v1046
        %v1063 = vpack.c.b16 %v1049, %v1048
        %v1064 = vpack.c.b16 %v1051, %v1050
        %v1065 = vpack.c.b16 %v1053, %v1052
        %v1066 = vpack.c.b16 %v1055, %v1054
        %v1067 = vpack.c.b16 %v1057, %v1056
        %v1068 = vpack.c.b16 %v1059, %v1058
        %v1069 = vpack.c.b16 %v1061, %v1060
        %1078 = vmatpush.bf16.msra.mxu0 %v1069
        %1079 = vmatpush.bf16.msra.mxu0 %v1068
        %1080 = vmatpush.bf16.msra.mxu0 %v1067
        %1081 = vmatpush.bf16.msra.mxu0 %v1066
        %1082 = vmatpush.bf16.msra.mxu0 %v1065
        %1083 = vmatpush.bf16.msra.mxu0 %v1064
        %1084 = vmatpush.bf16.msra.mxu0 %v1063
        %1085 = vmatpush.bf16.msra.mxu0 %v1062
        %1086 = vmatmul.bf16.gmra.mxu0 %v998
        %v1087 = vpop.f32.mrf.mxu0
        %v1088 = vadd.f32 0.0, %v1087
        %v1089 = vpop.f32.mrf.mxu0
        %v1090 = vadd.f32 0.0, %v1089
        %1091 = vmatmul.bf16.gmra.mxu0 %v999
        %v1092 = vpop.f32.mrf.mxu0
        %v1093 = vadd.f32 0.0, %v1092
        %v1094 = vpop.f32.mrf.mxu0
        %v1095 = vadd.f32 0.0, %v1094
        %1096 = vmatmul.bf16.gmra.mxu0 %v1000
        %v1097 = vpop.f32.mrf.mxu0
        %v1098 = vadd.f32 0.0, %v1097
        %v1099 = vpop.f32.mrf.mxu0
        %v1100 = vadd.f32 0.0, %v1099
        %1101 = vmatmul.bf16.gmra.mxu0 %v1001
        %v1102 = vpop.f32.mrf.mxu0
        %v1103 = vadd.f32 0.0, %v1102
        %v1104 = vpop.f32.mrf.mxu0
        %v1105 = vadd.f32 0.0, %v1104
        %1106 = vmatmul.bf16.gmra.mxu0 %v1002
        %v1107 = vpop.f32.mrf.mxu0
        %v1108 = vadd.f32 0.0, %v1107
        %v1109 = vpop.f32.mrf.mxu0
        %v1110 = vadd.f32 0.0, %v1109
        %1111 = vmatmul.bf16.gmra.mxu0 %v1003
        %v1112 = vpop.f32.mrf.mxu0
        %v1113 = vadd.f32 0.0, %v1112
        %v1114 = vpop.f32.mrf.mxu0
        %v1115 = vadd.f32 0.0, %v1114
        %1116 = vmatmul.bf16.gmra.mxu0 %v1004
        %v1117 = vpop.f32.mrf.mxu0
        %v1118 = vadd.f32 0.0, %v1117
        %v1119 = vpop.f32.mrf.mxu0
        %v1120 = vadd.f32 0.0, %v1119
        %1121 = vmatmul.bf16.gmra.mxu0 %v1005
        %v1122 = vpop.f32.mrf.mxu0
        %v1123 = vadd.f32 0.0, %v1122
        %v1124 = vpop.f32.mrf.mxu0
        %v1125 = vadd.f32 0.0, %v1124
        %1126 = vmatmul.bf16.gmra.mxu0 %v1006
        %v1127 = vpop.f32.mrf.mxu0
        %v1128 = vadd.f32 0.0, %v1127
        %v1129 = vpop.f32.mrf.mxu0
        %v1130 = vadd.f32 0.0, %v1129
        %1131 = vmatmul.bf16.gmra.mxu0 %v1007
        %v1132 = vpop.f32.mrf.mxu0
        %v1133 = vadd.f32 0.0, %v1132
        %v1134 = vpop.f32.mrf.mxu0
        %v1135 = vadd.f32 0.0, %v1134
        %1136 = vmatmul.bf16.gmra.mxu0 %v1008
        %v1137 = vpop.f32.mrf.mxu0
        %v1138 = vadd.f32 0.0, %v1137
        %v1139 = vpop.f32.mrf.mxu0
        %v1140 = vadd.f32 0.0, %v1139
        %1141 = vmatmul.bf16.gmra.mxu0 %v1009
        %v1142 = vpop.f32.mrf.mxu0
        %v1143 = vadd.f32 0.0, %v1142
        %v1144 = vpop.f32.mrf.mxu0
        %v1145 = vadd.f32 0.0, %v1144
        %1146 = vmatmul.bf16.gmra.mxu0 %v1010
        %v1147 = vpop.f32.mrf.mxu0
        %v1148 = vadd.f32 0.0, %v1147
        %v1149 = vpop.f32.mrf.mxu0
        %v1150 = vadd.f32 0.0, %v1149
        %1151 = vmatmul.bf16.gmra.mxu0 %v1011
        %v1152 = vpop.f32.mrf.mxu0
        %v1153 = vadd.f32 0.0, %v1152
        %v1154 = vpop.f32.mrf.mxu0
        %v1155 = vadd.f32 0.0, %v1154
        %1156 = vmatmul.bf16.gmra.mxu0 %v1012
        %v1157 = vpop.f32.mrf.mxu0
        %v1158 = vadd.f32 0.0, %v1157
        %v1159 = vpop.f32.mrf.mxu0
        %v1160 = vadd.f32 0.0, %v1159
        %1161 = vmatmul.bf16.gmra.mxu0 %v1013
        %v1162 = vpop.f32.mrf.mxu0
        %v1163 = vadd.f32 0.0, %v1162
        %v1164 = vpop.f32.mrf.mxu0
        %v1165 = vadd.f32 0.0, %v1164
        %1166 = vdwg.mxu0
        %v1167 = vadd.f32 %v853, %v1088
        %v1168 = vadd.f32 %v854, %v1090
        %v1169 = vadd.f32 %v855, %v1093
        %v1170 = vadd.f32 %v856, %v1095
        %v1171 = vadd.f32 %v857, %v1098
        %v1172 = vadd.f32 %v858, %v1100
        %v1173 = vadd.f32 %v859, %v1103
        %v1174 = vadd.f32 %v860, %v1105
        %v1175 = vadd.f32 %v861, %v1108
        %v1176 = vadd.f32 %v862, %v1110
        %v1177 = vadd.f32 %v863, %v1113
        %v1178 = vadd.f32 %v864, %v1115
        %v1179 = vadd.f32 %v865, %v1118
        %v1180 = vadd.f32 %v866, %v1120
        %v1181 = vadd.f32 %v867, %v1123
        %v1182 = vadd.f32 %v868, %v1125
        %v1183 = vadd.f32 %v869, %v1128
        %v1184 = vadd.f32 %v870, %v1130
        %v1185 = vadd.f32 %v871, %v1133
        %v1186 = vadd.f32 %v872, %v1135
        %v1187 = vadd.f32 %v873, %v1138
        %v1188 = vadd.f32 %v874, %v1140
        %v1189 = vadd.f32 %v875, %v1143
        %v1190 = vadd.f32 %v876, %v1145
        %v1191 = vadd.f32 %v877, %v1148
        %v1192 = vadd.f32 %v878, %v1150
        %v1193 = vadd.f32 %v879, %v1153
        %v1194 = vadd.f32 %v880, %v1155
        %v1195 = vadd.f32 %v881, %v1158
        %v1196 = vadd.f32 %v882, %v1160
        %v1197 = vadd.f32 %v883, %v1163
        %v1198 = vadd.f32 %v884, %v1165
        %v1199 = vxor.u32 %v1167, 2147483648
        %v1200 = vxor.u32 %v1168, 2147483648
        %v1201 = vxor.u32 %v1169, 2147483648
        %v1202 = vxor.u32 %v1170, 2147483648
        %v1203 = vxor.u32 %v1171, 2147483648
        %v1204 = vxor.u32 %v1172, 2147483648
        %v1205 = vxor.u32 %v1173, 2147483648
        %v1206 = vxor.u32 %v1174, 2147483648
        %v1207 = vxor.u32 %v1175, 2147483648
        %v1208 = vxor.u32 %v1176, 2147483648
        %v1209 = vxor.u32 %v1177, 2147483648
        %v1210 = vxor.u32 %v1178, 2147483648
        %v1211 = vxor.u32 %v1179, 2147483648
        %v1212 = vxor.u32 %v1180, 2147483648
        %v1213 = vxor.u32 %v1181, 2147483648
        %v1214 = vxor.u32 %v1182, 2147483648
        %v1215 = vxor.u32 %v1183, 2147483648
        %v1216 = vxor.u32 %v1184, 2147483648
        %v1217 = vxor.u32 %v1185, 2147483648
        %v1218 = vxor.u32 %v1186, 2147483648
        %v1219 = vxor.u32 %v1187, 2147483648
        %v1220 = vxor.u32 %v1188, 2147483648
        %v1221 = vxor.u32 %v1189, 2147483648
        %v1222 = vxor.u32 %v1190, 2147483648
        %v1223 = vxor.u32 %v1191, 2147483648
        %v1224 = vxor.u32 %v1192, 2147483648
        %v1225 = vxor.u32 %v1193, 2147483648
        %v1226 = vxor.u32 %v1194, 2147483648
        %v1227 = vxor.u32 %v1195, 2147483648
        %v1228 = vxor.u32 %v1196, 2147483648
        %v1229 = vxor.u32 %v1197, 2147483648
        %v1230 = vxor.u32 %v1198, 2147483648
        %v1231 = vmul.f32 %v1199, 1.442695
        %v1232 = vpow.pop %v1231
        %v1233 = vmul.f32 %v1200, 1.442695
        %v1234 = vpow.pop %v1233
        %v1235 = vmul.f32 %v1201, 1.442695
        %v1236 = vpow.pop %v1235
        %v1237 = vmul.f32 %v1202, 1.442695
        %v1238 = vpow.pop %v1237
        %v1239 = vmul.f32 %v1203, 1.442695
        %v1240 = vpow.pop %v1239
        %v1241 = vmul.f32 %v1204, 1.442695
        %v1242 = vpow.pop %v1241
        %v1243 = vmul.f32 %v1205, 1.442695
        %v1244 = vpow.pop %v1243
        %v1245 = vmul.f32 %v1206, 1.442695
        %v1246 = vpow.pop %v1245
        %v1247 = vmul.f32 %v1207, 1.442695
        %v1248 = vpow.pop %v1247
        %v1249 = vmul.f32 %v1208, 1.442695
        %v1250 = vpow.pop %v1249
        %v1251 = vmul.f32 %v1209, 1.442695
        %v1252 = vpow.pop %v1251
        %v1253 = vmul.f32 %v1210, 1.442695
        %v1254 = vpow.pop %v1253
        %v1255 = vmul.f32 %v1211, 1.442695
        %v1256 = vpow.pop %v1255
        %v1257 = vmul.f32 %v1212, 1.442695
        %v1258 = vpow.pop %v1257
        %v1259 = vmul.f32 %v1213, 1.442695
        %v1260 = vpow.pop %v1259
        %v1261 = vmul.f32 %v1214, 1.442695
        %v1262 = vpow.pop %v1261
        %v1263 = vmul.f32 %v1215, 1.442695
        %v1264 = vpow.pop %v1263
        %v1265 = vmul.f32 %v1216, 1.442695
        %v1266 = vpow.pop %v1265
        %v1267 = vmul.f32 %v1217, 1.442695
        %v1268 = vpow.pop %v1267
        %v1269 = vmul.f32 %v1218, 1.442695
        %v1270 = vpow.pop %v1269
        %v1271 = vmul.f32 %v1219, 1.442695
        %v1272 = vpow.pop %v1271
        %v1273 = vmul.f32 %v1220, 1.442695
        %v1274 = vpow.pop %v1273
        %v1275 = vmul.f32 %v1221, 1.442695
        %v1276 = vpow.pop %v1275
        %v1277 = vmul.f32 %v1222, 1.442695
        %v1278 = vpow.pop %v1277
        %v1279 = vmul.f32 %v1223, 1.442695
        %v1280 = vpow.pop %v1279
        %v1281 = vmul.f32 %v1224, 1.442695
        %v1282 = vpow.pop %v1281
        %v1283 = vmul.f32 %v1225, 1.442695
        %v1284 = vpow.pop %v1283
        %v1285 = vmul.f32 %v1226, 1.442695
        %v1286 = vpow.pop %v1285
        %v1287 = vmul.f32 %v1227, 1.442695
        %v1288 = vpow.pop %v1287
        %v1289 = vmul.f32 %v1228, 1.442695
        %v1290 = vpow.pop %v1289
        %v1291 = vmul.f32 %v1229, 1.442695
        %v1292 = vpow.pop %v1291
        %v1293 = vmul.f32 %v1230, 1.442695
        %v1294 = vpow.pop %v1293
        %v1295 = vadd.f32 %v1232, 1.0
        %v1296 = vadd.f32 %v1234, 1.0
        %v1297 = vadd.f32 %v1236, 1.0
        %v1298 = vadd.f32 %v1238, 1.0
        %v1299 = vadd.f32 %v1240, 1.0
        %v1300 = vadd.f32 %v1242, 1.0
        %v1301 = vadd.f32 %v1244, 1.0
        %v1302 = vadd.f32 %v1246, 1.0
        %v1303 = vadd.f32 %v1248, 1.0
        %v1304 = vadd.f32 %v1250, 1.0
        %v1305 = vadd.f32 %v1252, 1.0
        %v1306 = vadd.f32 %v1254, 1.0
        %v1307 = vadd.f32 %v1256, 1.0
        %v1308 = vadd.f32 %v1258, 1.0
        %v1309 = vadd.f32 %v1260, 1.0
        %v1310 = vadd.f32 %v1262, 1.0
        %v1311 = vadd.f32 %v1264, 1.0
        %v1312 = vadd.f32 %v1266, 1.0
        %v1313 = vadd.f32 %v1268, 1.0
        %v1314 = vadd.f32 %v1270, 1.0
        %v1315 = vadd.f32 %v1272, 1.0
        %v1316 = vadd.f32 %v1274, 1.0
        %v1317 = vadd.f32 %v1276, 1.0
        %v1318 = vadd.f32 %v1278, 1.0
        %v1319 = vadd.f32 %v1280, 1.0
        %v1320 = vadd.f32 %v1282, 1.0
        %v1321 = vadd.f32 %v1284, 1.0
        %v1322 = vadd.f32 %v1286, 1.0
        %v1323 = vadd.f32 %v1288, 1.0
        %v1324 = vadd.f32 %v1290, 1.0
        %v1325 = vadd.f32 %v1292, 1.0
        %v1326 = vadd.f32 %v1294, 1.0
        %v1327 = vrcp.pop %v1295
        %v1328 = vmul.f32 %v1295, %v1327
        %v1329 = vsub.f32 1.0, %v1328
        %v1330 = vmul.f32 %v1327, %v1329
        %v1331 = vadd.f32 %v1327, %v1330
        %vm1332 = vweird.f32 %v1295
        %vm1333 = vweird.f32 %v1327
        %vm1334 = vmor %vm1332, %vm1333
        %v1335 = vsel %vm1334, %v1327, %v1331
        %v1336 = vand.u32 2147483647, %v1295
        %vm1337 = vcmp.eq.f32.partialorder %v1336, 8.507059e+37
        %v1338 = vand.u32 %v1295, 2147483648
        %v1339 = vor.u32 1.1754944e-38, %v1338
        %v1340 = vsel %vm1337, %v1339, %v1335
        %v1341 = vmul.f32 1.0, %v1340
        %v1342 = vrcp.pop %v1296
        %v1343 = vmul.f32 %v1296, %v1342
        %v1344 = vsub.f32 1.0, %v1343
        %v1345 = vmul.f32 %v1342, %v1344
        %v1346 = vadd.f32 %v1342, %v1345
        %vm1347 = vweird.f32 %v1296
        %vm1348 = vweird.f32 %v1342
        %vm1349 = vmor %vm1347, %vm1348
        %v1350 = vsel %vm1349, %v1342, %v1346
        %v1351 = vand.u32 2147483647, %v1296
        %vm1352 = vcmp.eq.f32.partialorder %v1351, 8.507059e+37
        %v1353 = vand.u32 %v1296, 2147483648
        %v1354 = vor.u32 1.1754944e-38, %v1353
        %v1355 = vsel %vm1352, %v1354, %v1350
        %v1356 = vmul.f32 1.0, %v1355
        %v1357 = vrcp.pop %v1297
        %v1358 = vmul.f32 %v1297, %v1357
        %v1359 = vsub.f32 1.0, %v1358
        %v1360 = vmul.f32 %v1357, %v1359
        %v1361 = vadd.f32 %v1357, %v1360
        %vm1362 = vweird.f32 %v1297
        %vm1363 = vweird.f32 %v1357
        %vm1364 = vmor %vm1362, %vm1363
        %v1365 = vsel %vm1364, %v1357, %v1361
        %v1366 = vand.u32 2147483647, %v1297
        %vm1367 = vcmp.eq.f32.partialorder %v1366, 8.507059e+37
        %v1368 = vand.u32 %v1297, 2147483648
        %v1369 = vor.u32 1.1754944e-38, %v1368
        %v1370 = vsel %vm1367, %v1369, %v1365
        %v1371 = vmul.f32 1.0, %v1370
        %v1372 = vrcp.pop %v1298
        %v1373 = vmul.f32 %v1298, %v1372
        %v1374 = vsub.f32 1.0, %v1373
        %v1375 = vmul.f32 %v1372, %v1374
        %v1376 = vadd.f32 %v1372, %v1375
        %vm1377 = vweird.f32 %v1298
        %vm1378 = vweird.f32 %v1372
        %vm1379 = vmor %vm1377, %vm1378
        %v1380 = vsel %vm1379, %v1372, %v1376
        %v1381 = vand.u32 2147483647, %v1298
        %vm1382 = vcmp.eq.f32.partialorder %v1381, 8.507059e+37
        %v1383 = vand.u32 %v1298, 2147483648
        %v1384 = vor.u32 1.1754944e-38, %v1383
        %v1385 = vsel %vm1382, %v1384, %v1380
        %v1386 = vmul.f32 1.0, %v1385
        %v1387 = vrcp.pop %v1299
        %v1388 = vmul.f32 %v1299, %v1387
        %v1389 = vsub.f32 1.0, %v1388
        %v1390 = vmul.f32 %v1387, %v1389
        %v1391 = vadd.f32 %v1387, %v1390
        %vm1392 = vweird.f32 %v1299
        %vm1393 = vweird.f32 %v1387
        %vm1394 = vmor %vm1392, %vm1393
        %v1395 = vsel %vm1394, %v1387, %v1391
        %v1396 = vand.u32 2147483647, %v1299
        %vm1397 = vcmp.eq.f32.partialorder %v1396, 8.507059e+37
        %v1398 = vand.u32 %v1299, 2147483648
        %v1399 = vor.u32 1.1754944e-38, %v1398
        %v1400 = vsel %vm1397, %v1399, %v1395
        %v1401 = vmul.f32 1.0, %v1400
        %v1402 = vrcp.pop %v1300
        %v1403 = vmul.f32 %v1300, %v1402
        %v1404 = vsub.f32 1.0, %v1403
        %v1405 = vmul.f32 %v1402, %v1404
        %v1406 = vadd.f32 %v1402, %v1405
        %vm1407 = vweird.f32 %v1300
        %vm1408 = vweird.f32 %v1402
        %vm1409 = vmor %vm1407, %vm1408
        %v1410 = vsel %vm1409, %v1402, %v1406
        %v1411 = vand.u32 2147483647, %v1300
        %vm1412 = vcmp.eq.f32.partialorder %v1411, 8.507059e+37
        %v1413 = vand.u32 %v1300, 2147483648
        %v1414 = vor.u32 1.1754944e-38, %v1413
        %v1415 = vsel %vm1412, %v1414, %v1410
        %v1416 = vmul.f32 1.0, %v1415
        %v1417 = vrcp.pop %v1301
        %v1418 = vmul.f32 %v1301, %v1417
        %v1419 = vsub.f32 1.0, %v1418
        %v1420 = vmul.f32 %v1417, %v1419
        %v1421 = vadd.f32 %v1417, %v1420
        %vm1422 = vweird.f32 %v1301
        %vm1423 = vweird.f32 %v1417
        %vm1424 = vmor %vm1422, %vm1423
        %v1425 = vsel %vm1424, %v1417, %v1421
        %v1426 = vand.u32 2147483647, %v1301
        %vm1427 = vcmp.eq.f32.partialorder %v1426, 8.507059e+37
        %v1428 = vand.u32 %v1301, 2147483648
        %v1429 = vor.u32 1.1754944e-38, %v1428
        %v1430 = vsel %vm1427, %v1429, %v1425
        %v1431 = vmul.f32 1.0, %v1430
        %v1432 = vrcp.pop %v1302
        %v1433 = vmul.f32 %v1302, %v1432
        %v1434 = vsub.f32 1.0, %v1433
        %v1435 = vmul.f32 %v1432, %v1434
        %v1436 = vadd.f32 %v1432, %v1435
        %vm1437 = vweird.f32 %v1302
        %vm1438 = vweird.f32 %v1432
        %vm1439 = vmor %vm1437, %vm1438
        %v1440 = vsel %vm1439, %v1432, %v1436
        %v1441 = vand.u32 2147483647, %v1302
        %vm1442 = vcmp.eq.f32.partialorder %v1441, 8.507059e+37
        %v1443 = vand.u32 %v1302, 2147483648
        %v1444 = vor.u32 1.1754944e-38, %v1443
        %v1445 = vsel %vm1442, %v1444, %v1440
        %v1446 = vmul.f32 1.0, %v1445
        %v1447 = vrcp.pop %v1303
        %v1448 = vmul.f32 %v1303, %v1447
        %v1449 = vsub.f32 1.0, %v1448
        %v1450 = vmul.f32 %v1447, %v1449
        %v1451 = vadd.f32 %v1447, %v1450
        %vm1452 = vweird.f32 %v1303
        %vm1453 = vweird.f32 %v1447
        %vm1454 = vmor %vm1452, %vm1453
        %v1455 = vsel %vm1454, %v1447, %v1451
        %v1456 = vand.u32 2147483647, %v1303
        %vm1457 = vcmp.eq.f32.partialorder %v1456, 8.507059e+37
        %v1458 = vand.u32 %v1303, 2147483648
        %v1459 = vor.u32 1.1754944e-38, %v1458
        %v1460 = vsel %vm1457, %v1459, %v1455
        %v1461 = vmul.f32 1.0, %v1460
        %v1462 = vrcp.pop %v1304
        %v1463 = vmul.f32 %v1304, %v1462
        %v1464 = vsub.f32 1.0, %v1463
        %v1465 = vmul.f32 %v1462, %v1464
        %v1466 = vadd.f32 %v1462, %v1465
        %vm1467 = vweird.f32 %v1304
        %vm1468 = vweird.f32 %v1462
        %vm1469 = vmor %vm1467, %vm1468
        %v1470 = vsel %vm1469, %v1462, %v1466
        %v1471 = vand.u32 2147483647, %v1304
        %vm1472 = vcmp.eq.f32.partialorder %v1471, 8.507059e+37
        %v1473 = vand.u32 %v1304, 2147483648
        %v1474 = vor.u32 1.1754944e-38, %v1473
        %v1475 = vsel %vm1472, %v1474, %v1470
        %v1476 = vmul.f32 1.0, %v1475
        %v1477 = vrcp.pop %v1305
        %v1478 = vmul.f32 %v1305, %v1477
        %v1479 = vsub.f32 1.0, %v1478
        %v1480 = vmul.f32 %v1477, %v1479
        %v1481 = vadd.f32 %v1477, %v1480
        %vm1482 = vweird.f32 %v1305
        %vm1483 = vweird.f32 %v1477
        %vm1484 = vmor %vm1482, %vm1483
        %v1485 = vsel %vm1484, %v1477, %v1481
        %v1486 = vand.u32 2147483647, %v1305
        %vm1487 = vcmp.eq.f32.partialorder %v1486, 8.507059e+37
        %v1488 = vand.u32 %v1305, 2147483648
        %v1489 = vor.u32 1.1754944e-38, %v1488
        %v1490 = vsel %vm1487, %v1489, %v1485
        %v1491 = vmul.f32 1.0, %v1490
        %v1492 = vrcp.pop %v1306
        %v1493 = vmul.f32 %v1306, %v1492
        %v1494 = vsub.f32 1.0, %v1493
        %v1495 = vmul.f32 %v1492, %v1494
        %v1496 = vadd.f32 %v1492, %v1495
        %vm1497 = vweird.f32 %v1306
        %vm1498 = vweird.f32 %v1492
        %vm1499 = vmor %vm1497, %vm1498
        %v1500 = vsel %vm1499, %v1492, %v1496
        %v1501 = vand.u32 2147483647, %v1306
        %vm1502 = vcmp.eq.f32.partialorder %v1501, 8.507059e+37
        %v1503 = vand.u32 %v1306, 2147483648
        %v1504 = vor.u32 1.1754944e-38, %v1503
        %v1505 = vsel %vm1502, %v1504, %v1500
        %v1506 = vmul.f32 1.0, %v1505
        %v1507 = vrcp.pop %v1307
        %v1508 = vmul.f32 %v1307, %v1507
        %v1509 = vsub.f32 1.0, %v1508
        %v1510 = vmul.f32 %v1507, %v1509
        %v1511 = vadd.f32 %v1507, %v1510
        %vm1512 = vweird.f32 %v1307
        %vm1513 = vweird.f32 %v1507
        %vm1514 = vmor %vm1512, %vm1513
        %v1515 = vsel %vm1514, %v1507, %v1511
        %v1516 = vand.u32 2147483647, %v1307
        %vm1517 = vcmp.eq.f32.partialorder %v1516, 8.507059e+37
        %v1518 = vand.u32 %v1307, 2147483648
        %v1519 = vor.u32 1.1754944e-38, %v1518
        %v1520 = vsel %vm1517, %v1519, %v1515
        %v1521 = vmul.f32 1.0, %v1520
        %v1522 = vrcp.pop %v1308
        %v1523 = vmul.f32 %v1308, %v1522
        %v1524 = vsub.f32 1.0, %v1523
        %v1525 = vmul.f32 %v1522, %v1524
        %v1526 = vadd.f32 %v1522, %v1525
        %vm1527 = vweird.f32 %v1308
        %vm1528 = vweird.f32 %v1522
        %vm1529 = vmor %vm1527, %vm1528
        %v1530 = vsel %vm1529, %v1522, %v1526
        %v1531 = vand.u32 2147483647, %v1308
        %vm1532 = vcmp.eq.f32.partialorder %v1531, 8.507059e+37
        %v1533 = vand.u32 %v1308, 2147483648
        %v1534 = vor.u32 1.1754944e-38, %v1533
        %v1535 = vsel %vm1532, %v1534, %v1530
        %v1536 = vmul.f32 1.0, %v1535
        %v1537 = vrcp.pop %v1309
        %v1538 = vmul.f32 %v1309, %v1537
        %v1539 = vsub.f32 1.0, %v1538
        %v1540 = vmul.f32 %v1537, %v1539
        %v1541 = vadd.f32 %v1537, %v1540
        %vm1542 = vweird.f32 %v1309
        %vm1543 = vweird.f32 %v1537
        %vm1544 = vmor %vm1542, %vm1543
        %v1545 = vsel %vm1544, %v1537, %v1541
        %v1546 = vand.u32 2147483647, %v1309
        %vm1547 = vcmp.eq.f32.partialorder %v1546, 8.507059e+37
        %v1548 = vand.u32 %v1309, 2147483648
        %v1549 = vor.u32 1.1754944e-38, %v1548
        %v1550 = vsel %vm1547, %v1549, %v1545
        %v1551 = vmul.f32 1.0, %v1550
        %v1552 = vrcp.pop %v1310
        %v1553 = vmul.f32 %v1310, %v1552
        %v1554 = vsub.f32 1.0, %v1553
        %v1555 = vmul.f32 %v1552, %v1554
        %v1556 = vadd.f32 %v1552, %v1555
        %vm1557 = vweird.f32 %v1310
        %vm1558 = vweird.f32 %v1552
        %vm1559 = vmor %vm1557, %vm1558
        %v1560 = vsel %vm1559, %v1552, %v1556
        %v1561 = vand.u32 2147483647, %v1310
        %vm1562 = vcmp.eq.f32.partialorder %v1561, 8.507059e+37
        %v1563 = vand.u32 %v1310, 2147483648
        %v1564 = vor.u32 1.1754944e-38, %v1563
        %v1565 = vsel %vm1562, %v1564, %v1560
        %v1566 = vmul.f32 1.0, %v1565
        %v1567 = vrcp.pop %v1311
        %v1568 = vmul.f32 %v1311, %v1567
        %v1569 = vsub.f32 1.0, %v1568
        %v1570 = vmul.f32 %v1567, %v1569
        %v1571 = vadd.f32 %v1567, %v1570
        %vm1572 = vweird.f32 %v1311
        %vm1573 = vweird.f32 %v1567
        %vm1574 = vmor %vm1572, %vm1573
        %v1575 = vsel %vm1574, %v1567, %v1571
        %v1576 = vand.u32 2147483647, %v1311
        %vm1577 = vcmp.eq.f32.partialorder %v1576, 8.507059e+37
        %v1578 = vand.u32 %v1311, 2147483648
        %v1579 = vor.u32 1.1754944e-38, %v1578
        %v1580 = vsel %vm1577, %v1579, %v1575
        %v1581 = vmul.f32 1.0, %v1580
        %v1582 = vrcp.pop %v1312
        %v1583 = vmul.f32 %v1312, %v1582
        %v1584 = vsub.f32 1.0, %v1583
        %v1585 = vmul.f32 %v1582, %v1584
        %v1586 = vadd.f32 %v1582, %v1585
        %vm1587 = vweird.f32 %v1312
        %vm1588 = vweird.f32 %v1582
        %vm1589 = vmor %vm1587, %vm1588
        %v1590 = vsel %vm1589, %v1582, %v1586
        %v1591 = vand.u32 2147483647, %v1312
        %vm1592 = vcmp.eq.f32.partialorder %v1591, 8.507059e+37
        %v1593 = vand.u32 %v1312, 2147483648
        %v1594 = vor.u32 1.1754944e-38, %v1593
        %v1595 = vsel %vm1592, %v1594, %v1590
        %v1596 = vmul.f32 1.0, %v1595
        %v1597 = vrcp.pop %v1313
        %v1598 = vmul.f32 %v1313, %v1597
        %v1599 = vsub.f32 1.0, %v1598
        %v1600 = vmul.f32 %v1597, %v1599
        %v1601 = vadd.f32 %v1597, %v1600
        %vm1602 = vweird.f32 %v1313
        %vm1603 = vweird.f32 %v1597
        %vm1604 = vmor %vm1602, %vm1603
        %v1605 = vsel %vm1604, %v1597, %v1601
        %v1606 = vand.u32 2147483647, %v1313
        %vm1607 = vcmp.eq.f32.partialorder %v1606, 8.507059e+37
        %v1608 = vand.u32 %v1313, 2147483648
        %v1609 = vor.u32 1.1754944e-38, %v1608
        %v1610 = vsel %vm1607, %v1609, %v1605
        %v1611 = vmul.f32 1.0, %v1610
        %v1612 = vrcp.pop %v1314
        %v1613 = vmul.f32 %v1314, %v1612
        %v1614 = vsub.f32 1.0, %v1613
        %v1615 = vmul.f32 %v1612, %v1614
        %v1616 = vadd.f32 %v1612, %v1615
        %vm1617 = vweird.f32 %v1314
        %vm1618 = vweird.f32 %v1612
        %vm1619 = vmor %vm1617, %vm1618
        %v1620 = vsel %vm1619, %v1612, %v1616
        %v1621 = vand.u32 2147483647, %v1314
        %vm1622 = vcmp.eq.f32.partialorder %v1621, 8.507059e+37
        %v1623 = vand.u32 %v1314, 2147483648
        %v1624 = vor.u32 1.1754944e-38, %v1623
        %v1625 = vsel %vm1622, %v1624, %v1620
        %v1626 = vmul.f32 1.0, %v1625
        %v1627 = vrcp.pop %v1315
        %v1628 = vmul.f32 %v1315, %v1627
        %v1629 = vsub.f32 1.0, %v1628
        %v1630 = vmul.f32 %v1627, %v1629
        %v1631 = vadd.f32 %v1627, %v1630
        %vm1632 = vweird.f32 %v1315
        %vm1633 = vweird.f32 %v1627
        %vm1634 = vmor %vm1632, %vm1633
        %v1635 = vsel %vm1634, %v1627, %v1631
        %v1636 = vand.u32 2147483647, %v1315
        %vm1637 = vcmp.eq.f32.partialorder %v1636, 8.507059e+37
        %v1638 = vand.u32 %v1315, 2147483648
        %v1639 = vor.u32 1.1754944e-38, %v1638
        %v1640 = vsel %vm1637, %v1639, %v1635
        %v1641 = vmul.f32 1.0, %v1640
        %v1642 = vrcp.pop %v1316
        %v1643 = vmul.f32 %v1316, %v1642
        %v1644 = vsub.f32 1.0, %v1643
        %v1645 = vmul.f32 %v1642, %v1644
        %v1646 = vadd.f32 %v1642, %v1645
        %vm1647 = vweird.f32 %v1316
        %vm1648 = vweird.f32 %v1642
        %vm1649 = vmor %vm1647, %vm1648
        %v1650 = vsel %vm1649, %v1642, %v1646
        %v1651 = vand.u32 2147483647, %v1316
        %vm1652 = vcmp.eq.f32.partialorder %v1651, 8.507059e+37
        %v1653 = vand.u32 %v1316, 2147483648
        %v1654 = vor.u32 1.1754944e-38, %v1653
        %v1655 = vsel %vm1652, %v1654, %v1650
        %v1656 = vmul.f32 1.0, %v1655
        %v1657 = vrcp.pop %v1317
        %v1658 = vmul.f32 %v1317, %v1657
        %v1659 = vsub.f32 1.0, %v1658
        %v1660 = vmul.f32 %v1657, %v1659
        %v1661 = vadd.f32 %v1657, %v1660
        %vm1662 = vweird.f32 %v1317
        %vm1663 = vweird.f32 %v1657
        %vm1664 = vmor %vm1662, %vm1663
        %v1665 = vsel %vm1664, %v1657, %v1661
        %v1666 = vand.u32 2147483647, %v1317
        %vm1667 = vcmp.eq.f32.partialorder %v1666, 8.507059e+37
        %v1668 = vand.u32 %v1317, 2147483648
        %v1669 = vor.u32 1.1754944e-38, %v1668
        %v1670 = vsel %vm1667, %v1669, %v1665
        %v1671 = vmul.f32 1.0, %v1670
        %v1672 = vrcp.pop %v1318
        %v1673 = vmul.f32 %v1318, %v1672
        %v1674 = vsub.f32 1.0, %v1673
        %v1675 = vmul.f32 %v1672, %v1674
        %v1676 = vadd.f32 %v1672, %v1675
        %vm1677 = vweird.f32 %v1318
        %vm1678 = vweird.f32 %v1672
        %vm1679 = vmor %vm1677, %vm1678
        %v1680 = vsel %vm1679, %v1672, %v1676
        %v1681 = vand.u32 2147483647, %v1318
        %vm1682 = vcmp.eq.f32.partialorder %v1681, 8.507059e+37
        %v1683 = vand.u32 %v1318, 2147483648
        %v1684 = vor.u32 1.1754944e-38, %v1683
        %v1685 = vsel %vm1682, %v1684, %v1680
        %v1686 = vmul.f32 1.0, %v1685
        %v1687 = vrcp.pop %v1319
        %v1688 = vmul.f32 %v1319, %v1687
        %v1689 = vsub.f32 1.0, %v1688
        %v1690 = vmul.f32 %v1687, %v1689
        %v1691 = vadd.f32 %v1687, %v1690
        %vm1692 = vweird.f32 %v1319
        %vm1693 = vweird.f32 %v1687
        %vm1694 = vmor %vm1692, %vm1693
        %v1695 = vsel %vm1694, %v1687, %v1691
        %v1696 = vand.u32 2147483647, %v1319
        %vm1697 = vcmp.eq.f32.partialorder %v1696, 8.507059e+37
        %v1698 = vand.u32 %v1319, 2147483648
        %v1699 = vor.u32 1.1754944e-38, %v1698
        %v1700 = vsel %vm1697, %v1699, %v1695
        %v1701 = vmul.f32 1.0, %v1700
        %v1702 = vrcp.pop %v1320
        %v1703 = vmul.f32 %v1320, %v1702
        %v1704 = vsub.f32 1.0, %v1703
        %v1705 = vmul.f32 %v1702, %v1704
        %v1706 = vadd.f32 %v1702, %v1705
        %vm1707 = vweird.f32 %v1320
        %vm1708 = vweird.f32 %v1702
        %vm1709 = vmor %vm1707, %vm1708
        %v1710 = vsel %vm1709, %v1702, %v1706
        %v1711 = vand.u32 2147483647, %v1320
        %vm1712 = vcmp.eq.f32.partialorder %v1711, 8.507059e+37
        %v1713 = vand.u32 %v1320, 2147483648
        %v1714 = vor.u32 1.1754944e-38, %v1713
        %v1715 = vsel %vm1712, %v1714, %v1710
        %v1716 = vmul.f32 1.0, %v1715
        %v1717 = vrcp.pop %v1321
        %v1718 = vmul.f32 %v1321, %v1717
        %v1719 = vsub.f32 1.0, %v1718
        %v1720 = vmul.f32 %v1717, %v1719
        %v1721 = vadd.f32 %v1717, %v1720
        %vm1722 = vweird.f32 %v1321
        %vm1723 = vweird.f32 %v1717
        %vm1724 = vmor %vm1722, %vm1723
        %v1725 = vsel %vm1724, %v1717, %v1721
        %v1726 = vand.u32 2147483647, %v1321
        %vm1727 = vcmp.eq.f32.partialorder %v1726, 8.507059e+37
        %v1728 = vand.u32 %v1321, 2147483648
        %v1729 = vor.u32 1.1754944e-38, %v1728
        %v1730 = vsel %vm1727, %v1729, %v1725
        %v1731 = vmul.f32 1.0, %v1730
        %v1732 = vrcp.pop %v1322
        %v1733 = vmul.f32 %v1322, %v1732
        %v1734 = vsub.f32 1.0, %v1733
        %v1735 = vmul.f32 %v1732, %v1734
        %v1736 = vadd.f32 %v1732, %v1735
        %vm1737 = vweird.f32 %v1322
        %vm1738 = vweird.f32 %v1732
        %vm1739 = vmor %vm1737, %vm1738
        %v1740 = vsel %vm1739, %v1732, %v1736
        %v1741 = vand.u32 2147483647, %v1322
        %vm1742 = vcmp.eq.f32.partialorder %v1741, 8.507059e+37
        %v1743 = vand.u32 %v1322, 2147483648
        %v1744 = vor.u32 1.1754944e-38, %v1743
        %v1745 = vsel %vm1742, %v1744, %v1740
        %v1746 = vmul.f32 1.0, %v1745
        %v1747 = vrcp.pop %v1323
        %v1748 = vmul.f32 %v1323, %v1747
        %v1749 = vsub.f32 1.0, %v1748
        %v1750 = vmul.f32 %v1747, %v1749
        %v1751 = vadd.f32 %v1747, %v1750
        %vm1752 = vweird.f32 %v1323
        %vm1753 = vweird.f32 %v1747
        %vm1754 = vmor %vm1752, %vm1753
        %v1755 = vsel %vm1754, %v1747, %v1751
        %v1756 = vand.u32 2147483647, %v1323
        %vm1757 = vcmp.eq.f32.partialorder %v1756, 8.507059e+37
        %v1758 = vand.u32 %v1323, 2147483648
        %v1759 = vor.u32 1.1754944e-38, %v1758
        %v1760 = vsel %vm1757, %v1759, %v1755
        %v1761 = vmul.f32 1.0, %v1760
        %v1762 = vrcp.pop %v1324
        %v1763 = vmul.f32 %v1324, %v1762
        %v1764 = vsub.f32 1.0, %v1763
        %v1765 = vmul.f32 %v1762, %v1764
        %v1766 = vadd.f32 %v1762, %v1765
        %vm1767 = vweird.f32 %v1324
        %vm1768 = vweird.f32 %v1762
        %vm1769 = vmor %vm1767, %vm1768
        %v1770 = vsel %vm1769, %v1762, %v1766
        %v1771 = vand.u32 2147483647, %v1324
        %vm1772 = vcmp.eq.f32.partialorder %v1771, 8.507059e+37
        %v1773 = vand.u32 %v1324, 2147483648
        %v1774 = vor.u32 1.1754944e-38, %v1773
        %v1775 = vsel %vm1772, %v1774, %v1770
        %v1776 = vmul.f32 1.0, %v1775
        %v1777 = vrcp.pop %v1325
        %v1778 = vmul.f32 %v1325, %v1777
        %v1779 = vsub.f32 1.0, %v1778
        %v1780 = vmul.f32 %v1777, %v1779
        %v1781 = vadd.f32 %v1777, %v1780
        %vm1782 = vweird.f32 %v1325
        %vm1783 = vweird.f32 %v1777
        %vm1784 = vmor %vm1782, %vm1783
        %v1785 = vsel %vm1784, %v1777, %v1781
        %v1786 = vand.u32 2147483647, %v1325
        %vm1787 = vcmp.eq.f32.partialorder %v1786, 8.507059e+37
        %v1788 = vand.u32 %v1325, 2147483648
        %v1789 = vor.u32 1.1754944e-38, %v1788
        %v1790 = vsel %vm1787, %v1789, %v1785
        %v1791 = vmul.f32 1.0, %v1790
        %v1792 = vrcp.pop %v1326
        %v1793 = vmul.f32 %v1326, %v1792
        %v1794 = vsub.f32 1.0, %v1793
        %v1795 = vmul.f32 %v1792, %v1794
        %v1796 = vadd.f32 %v1792, %v1795
        %vm1797 = vweird.f32 %v1326
        %vm1798 = vweird.f32 %v1792
        %vm1799 = vmor %vm1797, %vm1798
        %v1800 = vsel %vm1799, %v1792, %v1796
        %v1801 = vand.u32 2147483647, %v1326
        %vm1802 = vcmp.eq.f32.partialorder %v1801, 8.507059e+37
        %v1803 = vand.u32 %v1326, 2147483648
        %v1804 = vor.u32 1.1754944e-38, %v1803
        %v1805 = vsel %vm1802, %v1804, %v1800
        %v1806 = vmul.f32 1.0, %v1805
        %v1807 = vtanh.pop %v1167
        %v1808 = vtanh.pop %v1168
        %v1809 = vtanh.pop %v1169
        %v1810 = vtanh.pop %v1170
        %v1811 = vtanh.pop %v1171
        %v1812 = vtanh.pop %v1172
        %v1813 = vtanh.pop %v1173
        %v1814 = vtanh.pop %v1174
        %v1815 = vtanh.pop %v1175
        %v1816 = vtanh.pop %v1176
        %v1817 = vtanh.pop %v1177
        %v1818 = vtanh.pop %v1178
        %v1819 = vtanh.pop %v1179
        %v1820 = vtanh.pop %v1180
        %v1821 = vtanh.pop %v1181
        %v1822 = vtanh.pop %v1182
        %v1823 = vtanh.pop %v1183
        %v1824 = vtanh.pop %v1184
        %v1825 = vtanh.pop %v1185
        %v1826 = vtanh.pop %v1186
        %v1827 = vtanh.pop %v1187
        %v1828 = vtanh.pop %v1188
        %v1829 = vtanh.pop %v1189
        %v1830 = vtanh.pop %v1190
        %v1831 = vtanh.pop %v1191
        %v1832 = vtanh.pop %v1192
        %v1833 = vtanh.pop %v1193
        %v1834 = vtanh.pop %v1194
        %v1835 = vtanh.pop %v1195
        %v1836 = vtanh.pop %v1196
        %v1837 = vtanh.pop %v1197
        %v1838 = vtanh.pop %v1198
        %v1839 = vld [vmem:[%s253] sm:$0xff]
        %v1840 = vld [vmem:[%s253 + $0x8] sm:$0xff]
        %v1841 = vld [vmem:[%s253 + $0x10] sm:$0xff]
        %v1842 = vld [vmem:[%s253 + $0x18] sm:$0xff]
        %v1843 = vld [vmem:[%s253 + $0x20] sm:$0xff]
        %v1844 = vld [vmem:[%s253 + $0x28] sm:$0xff]
        %v1845 = vld [vmem:[%s253 + $0x30] sm:$0xff]
        %v1846 = vld [vmem:[%s253 + $0x38] sm:$0xff]
        %v1847 = vld [vmem:[%s253 + $0x40] sm:$0xff]
        %v1848 = vld [vmem:[%s253 + $0x48] sm:$0xff]
        %v1849 = vld [vmem:[%s253 + $0x50] sm:$0xff]
        %v1850 = vld [vmem:[%s253 + $0x58] sm:$0xff]
        %v1851 = vld [vmem:[%s253 + $0x60] sm:$0xff]
        %v1852 = vld [vmem:[%s253 + $0x68] sm:$0xff]
        %v1853 = vld [vmem:[%s253 + $0x70] sm:$0xff]
        %v1854 = vld [vmem:[%s253 + $0x78] sm:$0xff]
        %v1855 = vld [vmem:[%s253 + $0x80] sm:$0xff]
        %v1856 = vld [vmem:[%s253 + $0x88] sm:$0xff]
        %v1857 = vld [vmem:[%s253 + $0x90] sm:$0xff]
        %v1858 = vld [vmem:[%s253 + $0x98] sm:$0xff]
        %v1859 = vld [vmem:[%s253 + $0xa0] sm:$0xff]
        %v1860 = vld [vmem:[%s253 + $0xa8] sm:$0xff]
        %v1861 = vld [vmem:[%s253 + $0xb0] sm:$0xff]
        %v1862 = vld [vmem:[%s253 + $0xb8] sm:$0xff]
        %v1863 = vld [vmem:[%s253 + $0xc0] sm:$0xff]
        %v1864 = vld [vmem:[%s253 + $0xc8] sm:$0xff]
        %v1865 = vld [vmem:[%s253 + $0xd0] sm:$0xff]
        %v1866 = vld [vmem:[%s253 + $0xd8] sm:$0xff]
        %v1867 = vld [vmem:[%s253 + $0xe0] sm:$0xff]
        %v1868 = vld [vmem:[%s253 + $0xe8] sm:$0xff]
        %v1869 = vld [vmem:[%s253 + $0xf0] sm:$0xff]
        %v1870 = vld [vmem:[%s253 + $0xf8] sm:$0xff]
        %1903 = vrot.lane.b32.xlu0 %v1839, 32
        %v1904 = vpop.permute.xlu0 %1903
        %1905 = vrot.lane.b32.xlu0 %v1840, 32
        %v1906 = vpop.permute.xlu0 %1905
        %1907 = vrot.lane.b32.xlu0 %v1841, 32
        %v1908 = vpop.permute.xlu0 %1907
        %1909 = vrot.lane.b32.xlu0 %v1842, 32
        %v1910 = vpop.permute.xlu0 %1909
        %1911 = vrot.lane.b32.xlu0 %v1843, 32
        %v1912 = vpop.permute.xlu0 %1911
        %1913 = vrot.lane.b32.xlu0 %v1844, 32
        %v1914 = vpop.permute.xlu0 %1913
        %1915 = vrot.lane.b32.xlu0 %v1845, 32
        %v1916 = vpop.permute.xlu0 %1915
        %1917 = vrot.lane.b32.xlu0 %v1846, 32
        %v1918 = vpop.permute.xlu0 %1917
        %1919 = vrot.lane.b32.xlu0 %v1847, 32
        %v1920 = vpop.permute.xlu0 %1919
        %1921 = vrot.lane.b32.xlu0 %v1848, 32
        %v1922 = vpop.permute.xlu0 %1921
        %1923 = vrot.lane.b32.xlu0 %v1849, 32
        %v1924 = vpop.permute.xlu0 %1923
        %1925 = vrot.lane.b32.xlu0 %v1850, 32
        %v1926 = vpop.permute.xlu0 %1925
        %1927 = vrot.lane.b32.xlu0 %v1851, 32
        %v1928 = vpop.permute.xlu0 %1927
        %1929 = vrot.lane.b32.xlu0 %v1852, 32
        %v1930 = vpop.permute.xlu0 %1929
        %1931 = vrot.lane.b32.xlu0 %v1853, 32
        %v1932 = vpop.permute.xlu0 %1931
        %1933 = vrot.lane.b32.xlu0 %v1854, 32
        %v1934 = vpop.permute.xlu0 %1933
        %1935 = vrot.lane.b32.xlu0 %v1855, 32
        %v1936 = vpop.permute.xlu0 %1935
        %1937 = vrot.lane.b32.xlu0 %v1856, 32
        %v1938 = vpop.permute.xlu0 %1937
        %1939 = vrot.lane.b32.xlu0 %v1857, 32
        %v1940 = vpop.permute.xlu0 %1939
        %1941 = vrot.lane.b32.xlu0 %v1858, 32
        %v1942 = vpop.permute.xlu0 %1941
        %1943 = vrot.lane.b32.xlu0 %v1859, 32
        %v1944 = vpop.permute.xlu0 %1943
        %1945 = vrot.lane.b32.xlu0 %v1860, 32
        %v1946 = vpop.permute.xlu0 %1945
        %1947 = vrot.lane.b32.xlu0 %v1861, 32
        %v1948 = vpop.permute.xlu0 %1947
        %1949 = vrot.lane.b32.xlu0 %v1862, 32
        %v1950 = vpop.permute.xlu0 %1949
        %1951 = vrot.lane.b32.xlu0 %v1863, 32
        %v1952 = vpop.permute.xlu0 %1951
        %1953 = vrot.lane.b32.xlu0 %v1864, 32
        %v1954 = vpop.permute.xlu0 %1953
        %1955 = vrot.lane.b32.xlu0 %v1865, 32
        %v1956 = vpop.permute.xlu0 %1955
        %1957 = vrot.lane.b32.xlu0 %v1866, 32
        %v1958 = vpop.permute.xlu0 %1957
        %1959 = vrot.lane.b32.xlu0 %v1867, 32
        %v1960 = vpop.permute.xlu0 %1959
        %1961 = vrot.lane.b32.xlu0 %v1868, 32
        %v1962 = vpop.permute.xlu0 %1961
        %1963 = vrot.lane.b32.xlu0 %v1869, 32
        %v1964 = vpop.permute.xlu0 %1963
        %1965 = vrot.lane.b32.xlu0 %v1870, 32
        %v1966 = vpop.permute.xlu0 %1965
        %v1999 = vmul.f32 %v1341, %v1904
        %v2000 = vmul.f32 %v1356, %v1906
        %v2001 = vmul.f32 %v1371, %v1908
        %v2002 = vmul.f32 %v1386, %v1910
        %v2003 = vmul.f32 %v1401, %v1912
        %v2004 = vmul.f32 %v1416, %v1914
        %v2005 = vmul.f32 %v1431, %v1916
        %v2006 = vmul.f32 %v1446, %v1918
        %v2007 = vmul.f32 %v1461, %v1920
        %v2008 = vmul.f32 %v1476, %v1922
        %v2009 = vmul.f32 %v1491, %v1924
        %v2010 = vmul.f32 %v1506, %v1926
        %v2011 = vmul.f32 %v1521, %v1928
        %v2012 = vmul.f32 %v1536, %v1930
        %v2013 = vmul.f32 %v1551, %v1932
        %v2014 = vmul.f32 %v1566, %v1934
        %v2015 = vmul.f32 %v1581, %v1936
        %v2016 = vmul.f32 %v1596, %v1938
        %v2017 = vmul.f32 %v1611, %v1940
        %v2018 = vmul.f32 %v1626, %v1942
        %v2019 = vmul.f32 %v1641, %v1944
        %v2020 = vmul.f32 %v1656, %v1946
        %v2021 = vmul.f32 %v1671, %v1948
        %v2022 = vmul.f32 %v1686, %v1950
        %v2023 = vmul.f32 %v1701, %v1952
        %v2024 = vmul.f32 %v1716, %v1954
        %v2025 = vmul.f32 %v1731, %v1956
        %v2026 = vmul.f32 %v1746, %v1958
        %v2027 = vmul.f32 %v1761, %v1960
        %v2028 = vmul.f32 %v1776, %v1962
        %v2029 = vmul.f32 %v1791, %v1964
        %v2030 = vmul.f32 %v1806, %v1966
        %2063 = vrot.lane.b32.xlu0 %v1807, 32
        %v2064 = vpop.permute.xlu0 %2063
        %2065 = vrot.lane.b32.xlu0 %v1808, 32
        %v2066 = vpop.permute.xlu0 %2065
        %2067 = vrot.lane.b32.xlu0 %v1809, 32
        %v2068 = vpop.permute.xlu0 %2067
        %2069 = vrot.lane.b32.xlu0 %v1810, 32
        %v2070 = vpop.permute.xlu0 %2069
        %2071 = vrot.lane.b32.xlu0 %v1811, 32
        %v2072 = vpop.permute.xlu0 %2071
        %2073 = vrot.lane.b32.xlu0 %v1812, 32
        %v2074 = vpop.permute.xlu0 %2073
        %2075 = vrot.lane.b32.xlu0 %v1813, 32
        %v2076 = vpop.permute.xlu0 %2075
        %2077 = vrot.lane.b32.xlu0 %v1814, 32
        %v2078 = vpop.permute.xlu0 %2077
        %2079 = vrot.lane.b32.xlu0 %v1815, 32
        %v2080 = vpop.permute.xlu0 %2079
        %2081 = vrot.lane.b32.xlu0 %v1816, 32
        %v2082 = vpop.permute.xlu0 %2081
        %2083 = vrot.lane.b32.xlu0 %v1817, 32
        %v2084 = vpop.permute.xlu0 %2083
        %2085 = vrot.lane.b32.xlu0 %v1818, 32
        %v2086 = vpop.permute.xlu0 %2085
        %2087 = vrot.lane.b32.xlu0 %v1819, 32
        %v2088 = vpop.permute.xlu0 %2087
        %2089 = vrot.lane.b32.xlu0 %v1820, 32
        %v2090 = vpop.permute.xlu0 %2089
        %2091 = vrot.lane.b32.xlu0 %v1821, 32
        %v2092 = vpop.permute.xlu0 %2091
        %2093 = vrot.lane.b32.xlu0 %v1822, 32
        %v2094 = vpop.permute.xlu0 %2093
        %2095 = vrot.lane.b32.xlu0 %v1823, 32
        %v2096 = vpop.permute.xlu0 %2095
        %2097 = vrot.lane.b32.xlu0 %v1824, 32
        %v2098 = vpop.permute.xlu0 %2097
        %2099 = vrot.lane.b32.xlu0 %v1825, 32
        %v2100 = vpop.permute.xlu0 %2099
        %2101 = vrot.lane.b32.xlu0 %v1826, 32
        %v2102 = vpop.permute.xlu0 %2101
        %2103 = vrot.lane.b32.xlu0 %v1827, 32
        %v2104 = vpop.permute.xlu0 %2103
        %2105 = vrot.lane.b32.xlu0 %v1828, 32
        %v2106 = vpop.permute.xlu0 %2105
        %2107 = vrot.lane.b32.xlu0 %v1829, 32
        %v2108 = vpop.permute.xlu0 %2107
        %2109 = vrot.lane.b32.xlu0 %v1830, 32
        %v2110 = vpop.permute.xlu0 %2109
        %2111 = vrot.lane.b32.xlu0 %v1831, 32
        %v2112 = vpop.permute.xlu0 %2111
        %2113 = vrot.lane.b32.xlu0 %v1832, 32
        %v2114 = vpop.permute.xlu0 %2113
        %2115 = vrot.lane.b32.xlu0 %v1833, 32
        %v2116 = vpop.permute.xlu0 %2115
        %2117 = vrot.lane.b32.xlu0 %v1834, 32
        %v2118 = vpop.permute.xlu0 %2117
        %2119 = vrot.lane.b32.xlu0 %v1835, 32
        %v2120 = vpop.permute.xlu0 %2119
        %2121 = vrot.lane.b32.xlu0 %v1836, 32
        %v2122 = vpop.permute.xlu0 %2121
        %2123 = vrot.lane.b32.xlu0 %v1837, 32
        %v2124 = vpop.permute.xlu0 %2123
        %2125 = vrot.lane.b32.xlu0 %v1838, 32
        %v2126 = vpop.permute.xlu0 %2125
        %v2159 = vmul.f32 %v1341, %v2064
        %v2160 = vmul.f32 %v1356, %v2066
        %v2161 = vmul.f32 %v1371, %v2068
        %v2162 = vmul.f32 %v1386, %v2070
        %v2163 = vmul.f32 %v1401, %v2072
        %v2164 = vmul.f32 %v1416, %v2074
        %v2165 = vmul.f32 %v1431, %v2076
        %v2166 = vmul.f32 %v1446, %v2078
        %v2167 = vmul.f32 %v1461, %v2080
        %v2168 = vmul.f32 %v1476, %v2082
        %v2169 = vmul.f32 %v1491, %v2084
        %v2170 = vmul.f32 %v1506, %v2086
        %v2171 = vmul.f32 %v1521, %v2088
        %v2172 = vmul.f32 %v1536, %v2090
        %v2173 = vmul.f32 %v1551, %v2092
        %v2174 = vmul.f32 %v1566, %v2094
        %v2175 = vmul.f32 %v1581, %v2096
        %v2176 = vmul.f32 %v1596, %v2098
        %v2177 = vmul.f32 %v1611, %v2100
        %v2178 = vmul.f32 %v1626, %v2102
        %v2179 = vmul.f32 %v1641, %v2104
        %v2180 = vmul.f32 %v1656, %v2106
        %v2181 = vmul.f32 %v1671, %v2108
        %v2182 = vmul.f32 %v1686, %v2110
        %v2183 = vmul.f32 %v1701, %v2112
        %v2184 = vmul.f32 %v1716, %v2114
        %v2185 = vmul.f32 %v1731, %v2116
        %v2186 = vmul.f32 %v1746, %v2118
        %v2187 = vmul.f32 %v1761, %v2120
        %v2188 = vmul.f32 %v1776, %v2122
        %v2189 = vmul.f32 %v1791, %v2124
        %v2190 = vmul.f32 %v1806, %v2126
        %2223 = vrot.lane.b32.xlu0 %v2159, 32
        %v2224 = vpop.permute.xlu0 %2223
        %2225 = vrot.lane.b32.xlu0 %v2160, 32
        %v2226 = vpop.permute.xlu0 %2225
        %2227 = vrot.lane.b32.xlu0 %v2161, 32
        %v2228 = vpop.permute.xlu0 %2227
        %2229 = vrot.lane.b32.xlu0 %v2162, 32
        %v2230 = vpop.permute.xlu0 %2229
        %2231 = vrot.lane.b32.xlu0 %v2163, 32
        %v2232 = vpop.permute.xlu0 %2231
        %2233 = vrot.lane.b32.xlu0 %v2164, 32
        %v2234 = vpop.permute.xlu0 %2233
        %2235 = vrot.lane.b32.xlu0 %v2165, 32
        %v2236 = vpop.permute.xlu0 %2235
        %2237 = vrot.lane.b32.xlu0 %v2166, 32
        %v2238 = vpop.permute.xlu0 %2237
        %2239 = vrot.lane.b32.xlu0 %v2167, 32
        %v2240 = vpop.permute.xlu0 %2239
        %2241 = vrot.lane.b32.xlu0 %v2168, 32
        %v2242 = vpop.permute.xlu0 %2241
        %2243 = vrot.lane.b32.xlu0 %v2169, 32
        %v2244 = vpop.permute.xlu0 %2243
        %2245 = vrot.lane.b32.xlu0 %v2170, 32
        %v2246 = vpop.permute.xlu0 %2245
        %2247 = vrot.lane.b32.xlu0 %v2171, 32
        %v2248 = vpop.permute.xlu0 %2247
        %2249 = vrot.lane.b32.xlu0 %v2172, 32
        %v2250 = vpop.permute.xlu0 %2249
        %2251 = vrot.lane.b32.xlu0 %v2173, 32
        %v2252 = vpop.permute.xlu0 %2251
        %2253 = vrot.lane.b32.xlu0 %v2174, 32
        %v2254 = vpop.permute.xlu0 %2253
        %2255 = vrot.lane.b32.xlu0 %v2175, 32
        %v2256 = vpop.permute.xlu0 %2255
        %2257 = vrot.lane.b32.xlu0 %v2176, 32
        %v2258 = vpop.permute.xlu0 %2257
        %2259 = vrot.lane.b32.xlu0 %v2177, 32
        %v2260 = vpop.permute.xlu0 %2259
        %2261 = vrot.lane.b32.xlu0 %v2178, 32
        %v2262 = vpop.permute.xlu0 %2261
        %2263 = vrot.lane.b32.xlu0 %v2179, 32
        %v2264 = vpop.permute.xlu0 %2263
        %2265 = vrot.lane.b32.xlu0 %v2180, 32
        %v2266 = vpop.permute.xlu0 %2265
        %2267 = vrot.lane.b32.xlu0 %v2181, 32
        %v2268 = vpop.permute.xlu0 %2267
        %2269 = vrot.lane.b32.xlu0 %v2182, 32
        %v2270 = vpop.permute.xlu0 %2269
        %2271 = vrot.lane.b32.xlu0 %v2183, 32
        %v2272 = vpop.permute.xlu0 %2271
        %2273 = vrot.lane.b32.xlu0 %v2184, 32
        %v2274 = vpop.permute.xlu0 %2273
        %2275 = vrot.lane.b32.xlu0 %v2185, 32
        %v2276 = vpop.permute.xlu0 %2275
        %2277 = vrot.lane.b32.xlu0 %v2186, 32
        %v2278 = vpop.permute.xlu0 %2277
        %2279 = vrot.lane.b32.xlu0 %v2187, 32
        %v2280 = vpop.permute.xlu0 %2279
        %2281 = vrot.lane.b32.xlu0 %v2188, 32
        %v2282 = vpop.permute.xlu0 %2281
        %2283 = vrot.lane.b32.xlu0 %v2189, 32
        %v2284 = vpop.permute.xlu0 %2283
        %2285 = vrot.lane.b32.xlu0 %v2190, 32
        %v2286 = vpop.permute.xlu0 %2285
        %v2319 = vadd.f32 %v1999, %v2224
        %v2320 = vadd.f32 %v2000, %v2226
        %v2321 = vadd.f32 %v2001, %v2228
        %v2322 = vadd.f32 %v2002, %v2230
        %v2323 = vadd.f32 %v2003, %v2232
        %v2324 = vadd.f32 %v2004, %v2234
        %v2325 = vadd.f32 %v2005, %v2236
        %v2326 = vadd.f32 %v2006, %v2238
        %v2327 = vadd.f32 %v2007, %v2240
        %v2328 = vadd.f32 %v2008, %v2242
        %v2329 = vadd.f32 %v2009, %v2244
        %v2330 = vadd.f32 %v2010, %v2246
        %v2331 = vadd.f32 %v2011, %v2248
        %v2332 = vadd.f32 %v2012, %v2250
        %v2333 = vadd.f32 %v2013, %v2252
        %v2334 = vadd.f32 %v2014, %v2254
        %v2335 = vadd.f32 %v2015, %v2256
        %v2336 = vadd.f32 %v2016, %v2258
        %v2337 = vadd.f32 %v2017, %v2260
        %v2338 = vadd.f32 %v2018, %v2262
        %v2339 = vadd.f32 %v2019, %v2264
        %v2340 = vadd.f32 %v2020, %v2266
        %v2341 = vadd.f32 %v2021, %v2268
        %v2342 = vadd.f32 %v2022, %v2270
        %v2343 = vadd.f32 %v2023, %v2272
        %v2344 = vadd.f32 %v2024, %v2274
        %v2345 = vadd.f32 %v2025, %v2276
        %v2346 = vadd.f32 %v2026, %v2278
        %v2347 = vadd.f32 %v2027, %v2280
        %v2348 = vadd.f32 %v2028, %v2282
        %v2349 = vadd.f32 %v2029, %v2284
        %v2350 = vadd.f32 %v2030, %v2286
        %v2351 = vtanh.pop %v2319
        %v2352 = vtanh.pop %v2320
        %v2353 = vtanh.pop %v2321
        %v2354 = vtanh.pop %v2322
        %v2355 = vtanh.pop %v2323
        %v2356 = vtanh.pop %v2324
        %v2357 = vtanh.pop %v2325
        %v2358 = vtanh.pop %v2326
        %v2359 = vtanh.pop %v2327
        %v2360 = vtanh.pop %v2328
        %v2361 = vtanh.pop %v2329
        %v2362 = vtanh.pop %v2330
        %v2363 = vtanh.pop %v2331
        %v2364 = vtanh.pop %v2332
        %v2365 = vtanh.pop %v2333
        %v2366 = vtanh.pop %v2334
        %v2367 = vtanh.pop %v2335
        %v2368 = vtanh.pop %v2336
        %v2369 = vtanh.pop %v2337
        %v2370 = vtanh.pop %v2338
        %v2371 = vtanh.pop %v2339
        %v2372 = vtanh.pop %v2340
        %v2373 = vtanh.pop %v2341
        %v2374 = vtanh.pop %v2342
        %v2375 = vtanh.pop %v2343
        %v2376 = vtanh.pop %v2344
        %v2377 = vtanh.pop %v2345
        %v2378 = vtanh.pop %v2346
        %v2379 = vtanh.pop %v2347
        %v2380 = vtanh.pop %v2348
        %v2381 = vtanh.pop %v2349
        %v2382 = vtanh.pop %v2350
        %2415 = vrot.lane.b32.xlu0 %v2351, 32
        %v2416 = vpop.permute.xlu0 %2415
        %2417 = vrot.lane.b32.xlu0 %v2352, 32
        %v2418 = vpop.permute.xlu0 %2417
        %2419 = vrot.lane.b32.xlu0 %v2353, 32
        %v2420 = vpop.permute.xlu0 %2419
        %2421 = vrot.lane.b32.xlu0 %v2354, 32
        %v2422 = vpop.permute.xlu0 %2421
        %2423 = vrot.lane.b32.xlu0 %v2355, 32
        %v2424 = vpop.permute.xlu0 %2423
        %2425 = vrot.lane.b32.xlu0 %v2356, 32
        %v2426 = vpop.permute.xlu0 %2425
        %2427 = vrot.lane.b32.xlu0 %v2357, 32
        %v2428 = vpop.permute.xlu0 %2427
        %2429 = vrot.lane.b32.xlu0 %v2358, 32
        %v2430 = vpop.permute.xlu0 %2429
        %2431 = vrot.lane.b32.xlu0 %v2359, 32
        %v2432 = vpop.permute.xlu0 %2431
        %2433 = vrot.lane.b32.xlu0 %v2360, 32
        %v2434 = vpop.permute.xlu0 %2433
        %2435 = vrot.lane.b32.xlu0 %v2361, 32
        %v2436 = vpop.permute.xlu0 %2435
        %2437 = vrot.lane.b32.xlu0 %v2362, 32
        %v2438 = vpop.permute.xlu0 %2437
        %2439 = vrot.lane.b32.xlu0 %v2363, 32
        %v2440 = vpop.permute.xlu0 %2439
        %2441 = vrot.lane.b32.xlu0 %v2364, 32
        %v2442 = vpop.permute.xlu0 %2441
        %2443 = vrot.lane.b32.xlu0 %v2365, 32
        %v2444 = vpop.permute.xlu0 %2443
        %2445 = vrot.lane.b32.xlu0 %v2366, 32
        %v2446 = vpop.permute.xlu0 %2445
        %2447 = vrot.lane.b32.xlu0 %v2367, 32
        %v2448 = vpop.permute.xlu0 %2447
        %2449 = vrot.lane.b32.xlu0 %v2368, 32
        %v2450 = vpop.permute.xlu0 %2449
        %2451 = vrot.lane.b32.xlu0 %v2369, 32
        %v2452 = vpop.permute.xlu0 %2451
        %2453 = vrot.lane.b32.xlu0 %v2370, 32
        %v2454 = vpop.permute.xlu0 %2453
        %2455 = vrot.lane.b32.xlu0 %v2371, 32
        %v2456 = vpop.permute.xlu0 %2455
        %2457 = vrot.lane.b32.xlu0 %v2372, 32
        %v2458 = vpop.permute.xlu0 %2457
        %2459 = vrot.lane.b32.xlu0 %v2373, 32
        %v2460 = vpop.permute.xlu0 %2459
        %2461 = vrot.lane.b32.xlu0 %v2374, 32
        %v2462 = vpop.permute.xlu0 %2461
        %2463 = vrot.lane.b32.xlu0 %v2375, 32
        %v2464 = vpop.permute.xlu0 %2463
        %2465 = vrot.lane.b32.xlu0 %v2376, 32
        %v2466 = vpop.permute.xlu0 %2465
        %2467 = vrot.lane.b32.xlu0 %v2377, 32
        %v2468 = vpop.permute.xlu0 %2467
        %2469 = vrot.lane.b32.xlu0 %v2378, 32
        %v2470 = vpop.permute.xlu0 %2469
        %2471 = vrot.lane.b32.xlu0 %v2379, 32
        %v2472 = vpop.permute.xlu0 %2471
        %2473 = vrot.lane.b32.xlu0 %v2380, 32
        %v2474 = vpop.permute.xlu0 %2473
        %2475 = vrot.lane.b32.xlu0 %v2381, 32
        %v2476 = vpop.permute.xlu0 %2475
        %2477 = vrot.lane.b32.xlu0 %v2382, 32
        %v2478 = vpop.permute.xlu0 %2477
        %v2511 = vmul.f32 %v1341, %v2416
        %v2512 = vmul.f32 %v1356, %v2418
        %v2513 = vmul.f32 %v1371, %v2420
        %v2514 = vmul.f32 %v1386, %v2422
        %v2515 = vmul.f32 %v1401, %v2424
        %v2516 = vmul.f32 %v1416, %v2426
        %v2517 = vmul.f32 %v1431, %v2428
        %v2518 = vmul.f32 %v1446, %v2430
        %v2519 = vmul.f32 %v1461, %v2432
        %v2520 = vmul.f32 %v1476, %v2434
        %v2521 = vmul.f32 %v1491, %v2436
        %v2522 = vmul.f32 %v1506, %v2438
        %v2523 = vmul.f32 %v1521, %v2440
        %v2524 = vmul.f32 %v1536, %v2442
        %v2525 = vmul.f32 %v1551, %v2444
        %v2526 = vmul.f32 %v1566, %v2446
        %v2527 = vmul.f32 %v1581, %v2448
        %v2528 = vmul.f32 %v1596, %v2450
        %v2529 = vmul.f32 %v1611, %v2452
        %v2530 = vmul.f32 %v1626, %v2454
        %v2531 = vmul.f32 %v1641, %v2456
        %v2532 = vmul.f32 %v1656, %v2458
        %v2533 = vmul.f32 %v1671, %v2460
        %v2534 = vmul.f32 %v1686, %v2462
        %v2535 = vmul.f32 %v1701, %v2464
        %v2536 = vmul.f32 %v1716, %v2466
        %v2537 = vmul.f32 %v1731, %v2468
        %v2538 = vmul.f32 %v1746, %v2470
        %v2539 = vmul.f32 %v1761, %v2472
        %v2540 = vmul.f32 %v1776, %v2474
        %v2541 = vmul.f32 %v1791, %v2476
        %v2542 = vmul.f32 %v1806, %v2478
        %2575 = vrot.lane.b32.xlu0 %v2319, 96
        %v2576 = vpop.permute.xlu0 %2575
        %2577 = vrot.lane.b32.xlu0 %v2320, 96
        %v2578 = vpop.permute.xlu0 %2577
        %2579 = vrot.lane.b32.xlu0 %v2321, 96
        %v2580 = vpop.permute.xlu0 %2579
        %2581 = vrot.lane.b32.xlu0 %v2322, 96
        %v2582 = vpop.permute.xlu0 %2581
        %2583 = vrot.lane.b32.xlu0 %v2323, 96
        %v2584 = vpop.permute.xlu0 %2583
        %2585 = vrot.lane.b32.xlu0 %v2324, 96
        %v2586 = vpop.permute.xlu0 %2585
        %2587 = vrot.lane.b32.xlu0 %v2325, 96
        %v2588 = vpop.permute.xlu0 %2587
        %2589 = vrot.lane.b32.xlu0 %v2326, 96
        %v2590 = vpop.permute.xlu0 %2589
        %2591 = vrot.lane.b32.xlu0 %v2327, 96
        %v2592 = vpop.permute.xlu0 %2591
        %2593 = vrot.lane.b32.xlu0 %v2328, 96
        %v2594 = vpop.permute.xlu0 %2593
        %2595 = vrot.lane.b32.xlu0 %v2329, 96
        %v2596 = vpop.permute.xlu0 %2595
        %2597 = vrot.lane.b32.xlu0 %v2330, 96
        %v2598 = vpop.permute.xlu0 %2597
        %2599 = vrot.lane.b32.xlu0 %v2331, 96
        %v2600 = vpop.permute.xlu0 %2599
        %2601 = vrot.lane.b32.xlu0 %v2332, 96
        %v2602 = vpop.permute.xlu0 %2601
        %2603 = vrot.lane.b32.xlu0 %v2333, 96
        %v2604 = vpop.permute.xlu0 %2603
        %2605 = vrot.lane.b32.xlu0 %v2334, 96
        %v2606 = vpop.permute.xlu0 %2605
        %2607 = vrot.lane.b32.xlu0 %v2335, 96
        %v2608 = vpop.permute.xlu0 %2607
        %2609 = vrot.lane.b32.xlu0 %v2336, 96
        %v2610 = vpop.permute.xlu0 %2609
        %2611 = vrot.lane.b32.xlu0 %v2337, 96
        %v2612 = vpop.permute.xlu0 %2611
        %2613 = vrot.lane.b32.xlu0 %v2338, 96
        %v2614 = vpop.permute.xlu0 %2613
        %2615 = vrot.lane.b32.xlu0 %v2339, 96
        %v2616 = vpop.permute.xlu0 %2615
        %2617 = vrot.lane.b32.xlu0 %v2340, 96
        %v2618 = vpop.permute.xlu0 %2617
        %2619 = vrot.lane.b32.xlu0 %v2341, 96
        %v2620 = vpop.permute.xlu0 %2619
        %2621 = vrot.lane.b32.xlu0 %v2342, 96
        %v2622 = vpop.permute.xlu0 %2621
        %2623 = vrot.lane.b32.xlu0 %v2343, 96
        %v2624 = vpop.permute.xlu0 %2623
        %2625 = vrot.lane.b32.xlu0 %v2344, 96
        %v2626 = vpop.permute.xlu0 %2625
        %2627 = vrot.lane.b32.xlu0 %v2345, 96
        %v2628 = vpop.permute.xlu0 %2627
        %2629 = vrot.lane.b32.xlu0 %v2346, 96
        %v2630 = vpop.permute.xlu0 %2629
        %2631 = vrot.lane.b32.xlu0 %v2347, 96
        %v2632 = vpop.permute.xlu0 %2631
        %2633 = vrot.lane.b32.xlu0 %v2348, 96
        %v2634 = vpop.permute.xlu0 %2633
        %2635 = vrot.lane.b32.xlu0 %v2349, 96
        %v2636 = vpop.permute.xlu0 %2635
        %2637 = vrot.lane.b32.xlu0 %v2350, 96
        %v2638 = vpop.permute.xlu0 %2637
        %vm2671 = vcmask 261120
        %2672 = vst.msk [vmem:[%s243] sm:$0xff] %vm2671, %v2576
        %2673 = vst.msk [vmem:[%s243 + $0x8] sm:$0xff] %vm2671, %v2578
        %2674 = vst.msk [vmem:[%s243 + $0x10] sm:$0xff] %vm2671, %v2580
        %2675 = vst.msk [vmem:[%s243 + $0x18] sm:$0xff] %vm2671, %v2582
        %2676 = vst.msk [vmem:[%s243 + $0x20] sm:$0xff] %vm2671, %v2584
        %2677 = vst.msk [vmem:[%s243 + $0x28] sm:$0xff] %vm2671, %v2586
        %2678 = vst.msk [vmem:[%s243 + $0x30] sm:$0xff] %vm2671, %v2588
        %2679 = vst.msk [vmem:[%s243 + $0x38] sm:$0xff] %vm2671, %v2590
        %2680 = vst.msk [vmem:[%s243 + $0x40] sm:$0xff] %vm2671, %v2592
        %2681 = vst.msk [vmem:[%s243 + $0x48] sm:$0xff] %vm2671, %v2594
        %2682 = vst.msk [vmem:[%s243 + $0x50] sm:$0xff] %vm2671, %v2596
        %2683 = vst.msk [vmem:[%s243 + $0x58] sm:$0xff] %vm2671, %v2598
        %2684 = vst.msk [vmem:[%s243 + $0x60] sm:$0xff] %vm2671, %v2600
        %2685 = vst.msk [vmem:[%s243 + $0x68] sm:$0xff] %vm2671, %v2602
        %2686 = vst.msk [vmem:[%s243 + $0x70] sm:$0xff] %vm2671, %v2604
        %2687 = vst.msk [vmem:[%s243 + $0x78] sm:$0xff] %vm2671, %v2606
        %2688 = vst.msk [vmem:[%s243 + $0x80] sm:$0xff] %vm2671, %v2608
        %2689 = vst.msk [vmem:[%s243 + $0x88] sm:$0xff] %vm2671, %v2610
        %2690 = vst.msk [vmem:[%s243 + $0x90] sm:$0xff] %vm2671, %v2612
        %2691 = vst.msk [vmem:[%s243 + $0x98] sm:$0xff] %vm2671, %v2614
        %2692 = vst.msk [vmem:[%s243 + $0xa0] sm:$0xff] %vm2671, %v2616
        %2693 = vst.msk [vmem:[%s243 + $0xa8] sm:$0xff] %vm2671, %v2618
        %2694 = vst.msk [vmem:[%s243 + $0xb0] sm:$0xff] %vm2671, %v2620
        %2695 = vst.msk [vmem:[%s243 + $0xb8] sm:$0xff] %vm2671, %v2622
        %2696 = vst.msk [vmem:[%s243 + $0xc0] sm:$0xff] %vm2671, %v2624
        %2697 = vst.msk [vmem:[%s243 + $0xc8] sm:$0xff] %vm2671, %v2626
        %2698 = vst.msk [vmem:[%s243 + $0xd0] sm:$0xff] %vm2671, %v2628
        %2699 = vst.msk [vmem:[%s243 + $0xd8] sm:$0xff] %vm2671, %v2630
        %2700 = vst.msk [vmem:[%s243 + $0xe0] sm:$0xff] %vm2671, %v2632
        %2701 = vst.msk [vmem:[%s243 + $0xe8] sm:$0xff] %vm2671, %v2634
        %2702 = vst.msk [vmem:[%s243 + $0xf0] sm:$0xff] %vm2671, %v2636
        %2703 = vst.msk [vmem:[%s243 + $0xf8] sm:$0xff] %vm2671, %v2638
        %2736 = vrot.lane.b32.xlu0 %v2511, 64
        %v2737 = vpop.permute.xlu0 %2736
        %2738 = vrot.lane.b32.xlu0 %v2512, 64
        %v2739 = vpop.permute.xlu0 %2738
        %2740 = vrot.lane.b32.xlu0 %v2513, 64
        %v2741 = vpop.permute.xlu0 %2740
        %2742 = vrot.lane.b32.xlu0 %v2514, 64
        %v2743 = vpop.permute.xlu0 %2742
        %2744 = vrot.lane.b32.xlu0 %v2515, 64
        %v2745 = vpop.permute.xlu0 %2744
        %2746 = vrot.lane.b32.xlu0 %v2516, 64
        %v2747 = vpop.permute.xlu0 %2746
        %2748 = vrot.lane.b32.xlu0 %v2517, 64
        %v2749 = vpop.permute.xlu0 %2748
        %2750 = vrot.lane.b32.xlu0 %v2518, 64
        %v2751 = vpop.permute.xlu0 %2750
        %2752 = vrot.lane.b32.xlu0 %v2519, 64
        %v2753 = vpop.permute.xlu0 %2752
        %2754 = vrot.lane.b32.xlu0 %v2520, 64
        %v2755 = vpop.permute.xlu0 %2754
        %2756 = vrot.lane.b32.xlu0 %v2521, 64
        %v2757 = vpop.permute.xlu0 %2756
        %2758 = vrot.lane.b32.xlu0 %v2522, 64
        %v2759 = vpop.permute.xlu0 %2758
        %2760 = vrot.lane.b32.xlu0 %v2523, 64
        %v2761 = vpop.permute.xlu0 %2760
        %2762 = vrot.lane.b32.xlu0 %v2524, 64
        %v2763 = vpop.permute.xlu0 %2762
        %2764 = vrot.lane.b32.xlu0 %v2525, 64
        %v2765 = vpop.permute.xlu0 %2764
        %2766 = vrot.lane.b32.xlu0 %v2526, 64
        %v2767 = vpop.permute.xlu0 %2766
        %2768 = vrot.lane.b32.xlu0 %v2527, 64
        %v2769 = vpop.permute.xlu0 %2768
        %2770 = vrot.lane.b32.xlu0 %v2528, 64
        %v2771 = vpop.permute.xlu0 %2770
        %2772 = vrot.lane.b32.xlu0 %v2529, 64
        %v2773 = vpop.permute.xlu0 %2772
        %2774 = vrot.lane.b32.xlu0 %v2530, 64
        %v2775 = vpop.permute.xlu0 %2774
        %2776 = vrot.lane.b32.xlu0 %v2531, 64
        %v2777 = vpop.permute.xlu0 %2776
        %2778 = vrot.lane.b32.xlu0 %v2532, 64
        %v2779 = vpop.permute.xlu0 %2778
        %2780 = vrot.lane.b32.xlu0 %v2533, 64
        %v2781 = vpop.permute.xlu0 %2780
        %2782 = vrot.lane.b32.xlu0 %v2534, 64
        %v2783 = vpop.permute.xlu0 %2782
        %2784 = vrot.lane.b32.xlu0 %v2535, 64
        %v2785 = vpop.permute.xlu0 %2784
        %2786 = vrot.lane.b32.xlu0 %v2536, 64
        %v2787 = vpop.permute.xlu0 %2786
        %2788 = vrot.lane.b32.xlu0 %v2537, 64
        %v2789 = vpop.permute.xlu0 %2788
        %2790 = vrot.lane.b32.xlu0 %v2538, 64
        %v2791 = vpop.permute.xlu0 %2790
        %2792 = vrot.lane.b32.xlu0 %v2539, 64
        %v2793 = vpop.permute.xlu0 %2792
        %2794 = vrot.lane.b32.xlu0 %v2540, 64
        %v2795 = vpop.permute.xlu0 %2794
        %2796 = vrot.lane.b32.xlu0 %v2541, 64
        %v2797 = vpop.permute.xlu0 %2796
        %2798 = vrot.lane.b32.xlu0 %v2542, 64
        %v2799 = vpop.permute.xlu0 %2798
        %2832 = vst.msk [vmem:[%s236] sm:$0xff] %vm2671, %v2737
        %2833 = vst.msk [vmem:[%s236 + $0x8] sm:$0xff] %vm2671, %v2739
        %2834 = vst.msk [vmem:[%s236 + $0x10] sm:$0xff] %vm2671, %v2741
        %2835 = vst.msk [vmem:[%s236 + $0x18] sm:$0xff] %vm2671, %v2743
        %2836 = vst.msk [vmem:[%s236 + $0x20] sm:$0xff] %vm2671, %v2745
        %2837 = vst.msk [vmem:[%s236 + $0x28] sm:$0xff] %vm2671, %v2747
        %2838 = vst.msk [vmem:[%s236 + $0x30] sm:$0xff] %vm2671, %v2749
        %2839 = vst.msk [vmem:[%s236 + $0x38] sm:$0xff] %vm2671, %v2751
        %2840 = vst.msk [vmem:[%s236 + $0x40] sm:$0xff] %vm2671, %v2753
        %2841 = vst.msk [vmem:[%s236 + $0x48] sm:$0xff] %vm2671, %v2755
        %2842 = vst.msk [vmem:[%s236 + $0x50] sm:$0xff] %vm2671, %v2757
        %2843 = vst.msk [vmem:[%s236 + $0x58] sm:$0xff] %vm2671, %v2759
        %2844 = vst.msk [vmem:[%s236 + $0x60] sm:$0xff] %vm2671, %v2761
        %2845 = vst.msk [vmem:[%s236 + $0x68] sm:$0xff] %vm2671, %v2763
        %2846 = vst.msk [vmem:[%s236 + $0x70] sm:$0xff] %vm2671, %v2765
        %2847 = vst.msk [vmem:[%s236 + $0x78] sm:$0xff] %vm2671, %v2767
        %2848 = vst.msk [vmem:[%s236 + $0x80] sm:$0xff] %vm2671, %v2769
        %2849 = vst.msk [vmem:[%s236 + $0x88] sm:$0xff] %vm2671, %v2771
        %2850 = vst.msk [vmem:[%s236 + $0x90] sm:$0xff] %vm2671, %v2773
        %2851 = vst.msk [vmem:[%s236 + $0x98] sm:$0xff] %vm2671, %v2775
        %2852 = vst.msk [vmem:[%s236 + $0xa0] sm:$0xff] %vm2671, %v2777
        %2853 = vst.msk [vmem:[%s236 + $0xa8] sm:$0xff] %vm2671, %v2779
        %2854 = vst.msk [vmem:[%s236 + $0xb0] sm:$0xff] %vm2671, %v2781
        %2855 = vst.msk [vmem:[%s236 + $0xb8] sm:$0xff] %vm2671, %v2783
        %2856 = vst.msk [vmem:[%s236 + $0xc0] sm:$0xff] %vm2671, %v2785
        %2857 = vst.msk [vmem:[%s236 + $0xc8] sm:$0xff] %vm2671, %v2787
        %2858 = vst.msk [vmem:[%s236 + $0xd0] sm:$0xff] %vm2671, %v2789
        %2859 = vst.msk [vmem:[%s236 + $0xd8] sm:$0xff] %vm2671, %v2791
        %2860 = vst.msk [vmem:[%s236 + $0xe0] sm:$0xff] %vm2671, %v2793
        %2861 = vst.msk [vmem:[%s236 + $0xe8] sm:$0xff] %vm2671, %v2795
        %2862 = vst.msk [vmem:[%s236 + $0xf0] sm:$0xff] %vm2671, %v2797
        %2863 = vst.msk [vmem:[%s236 + $0xf8] sm:$0xff] %vm2671, %v2799
        %s2864 = sand.u32 %s125, 1
        %s2865 = scalar_lea.sflag [#allocation3], %s2864
        %s2866 = sand.u32 %s125, 1
        %s2867 = smul.addr %s2866, 256
        %s2868 = scalar_lea.vmem [#allocation2], %s2867
        %s2869 = sand.u32 %s151, 1
        %s2870 = scalar_lea.sflag [#allocation5], %s2869
        %s2871 = sand.u32 %s151, 1
        %s2872 = smul.addr %s2871, 256
        %s2873 = scalar_lea.vmem [#allocation4], %s2872
        // Predicated region
        $region37: #{conv_lstm2d.1} parent=35 // pred_check
          %p2874 = pneg %p135
        $region38: #{conv_lstm2d.1} parent=35 // pred_check_branch
          %2876 = sbr.rel (%p2874) target = $region40
        $region39: #{conv_lstm2d.1} parent=35 // pred_region
          %2878 = vsyncadd %s2865, 0
          %s2879 = smul.addr %s23, 32
          %s2880 = smul.addr %s2879, 8
          %s2881 = scalar_lea.hbm %s4, %s2880
          %s2882 = sshll.u32 %s2868, 4
          %s2883 = int_to_ptr.vmem [resolvable:$true] %s2882
          %s2884 = sshll.u32 %s2881, 4
          %s2885 = int_to_ptr.hbm [resolvable:$true] %s2884
          %2890 = dma.vmem_to_hbm [thread:$0]  %s2883, 4096, %s2885, %s2865, 128, 128, 8
        $region40: #{conv_lstm2d.1} parent=35 // pred_fallthru
          _
        // Predicated region
        $region41: #{conv_lstm2d.1} parent=35 // pred_check
          %p2891 = pneg %p161
        $region42: #{conv_lstm2d.1} parent=35 // pred_check_branch
          %2893 = sbr.rel (%p2891) target = $region44
        $region43: #{conv_lstm2d.1} parent=35 // pred_region
          %2895 = vsyncadd %s2870, 0
          %s2896 = smul.addr %s23, 32
          %s2897 = smul.addr %s2896, 8
          %s2898 = scalar_lea.hbm %s5, %s2897
          %s2899 = sshll.u32 %s2873, 4
          %s2900 = int_to_ptr.vmem [resolvable:$true] %s2899
          %s2901 = sshll.u32 %s2898, 4
          %s2902 = int_to_ptr.hbm [resolvable:$true] %s2901
          %2907 = dma.vmem_to_hbm [thread:$0]  %s2900, 4096, %s2902, %s2870, 128, 128, 8
        $region44: #{conv_lstm2d.1} parent=35 // pred_fallthru
          _
      $region36: #{conv_lstm2d.1} parent=5 // pred_fallthru
        _
      %p2908 = scmp.le.s32.totalorder 2, %s18
      // Predicated region
      $region45: #{conv_lstm2d.1} parent=5 // pred_check
        %p2909 = pneg %p2908
      $region46: #{conv_lstm2d.1} parent=5 // pred_check_branch
        %2911 = sbr.rel (%p2909) target = $region48
      $region47: #{conv_lstm2d.1} parent=5 // pred_region
        %s2912 = ssub.s32 %s18, 2
        // Predicated region
        $region49: #{conv_lstm2d.1} parent=47 // pred_check
          %p2913 = pneg %p141
        $region50: #{conv_lstm2d.1} parent=47 // pred_check_branch
          %2915 = sbr.rel (%p2913) target = $region52
        $region51: #{conv_lstm2d.1} parent=47 // pred_region
          %s2916 = sand.u32 %s126, 1
          %s2917 = scalar_lea.sflag [#allocation3], %s2916
          %s2918 = sand.u32 %s126, 1
          %s2919 = smul.addr %s2918, 256
          %s2920 = scalar_lea.vmem [#allocation2], %s2919
          %2922 = dma.done %s2917, 4096
        $region52: #{conv_lstm2d.1} parent=47 // pred_fallthru
          _
        // Predicated region
        $region53: #{conv_lstm2d.1} parent=47 // pred_check
          %p2923 = pneg %p167
        $region54: #{conv_lstm2d.1} parent=47 // pred_check_branch
          %2925 = sbr.rel (%p2923) target = $region56
        $region55: #{conv_lstm2d.1} parent=47 // pred_region
          %s2926 = sand.u32 %s152, 1
          %s2927 = scalar_lea.sflag [#allocation5], %s2926
          %s2928 = sand.u32 %s152, 1
          %s2929 = smul.addr %s2928, 256
          %s2930 = scalar_lea.vmem [#allocation4], %s2929
          %2932 = dma.done %s2927, 4096
        $region56: #{conv_lstm2d.1} parent=47 // pred_fallthru
          _
      $region48: #{conv_lstm2d.1} parent=5 // pred_fallthru
        _
    $region6: #{conv_lstm2d.1} parent=1 // loop_footer
      %s22 = sadd.s32 1, %s18
    $region7: #{conv_lstm2d.1} parent=1 // loop_footer_branch
      %17 = sbr.rel target = $region3
    $region8: #{conv_lstm2d.1} parent=1 // loop_exit
      _
    %2933 = vsyncpa [#allocation3], 1
    %s2934 = scalar_lea.sflag [#allocation3], 1
    %2935 = vsyncpa %s2934, 1
    %2936 = vsyncpa [#allocation5], 1
    %s2937 = scalar_lea.sflag [#allocation5], 1
    %2938 = vsyncpa %s2937, 1

</llo_original>
